<compile_context>
chip_gen: v6e
topology: v6e:2x2x1
jax: 0.10.0
libtpu: 0.0.40
codegen_flags: <defaults>
</compile_context>

<pallas_src>
import jax
import jax.numpy as jnp
from jax.experimental import pallas as pl
from jax.experimental.pallas import tpu as pltpu

LOGIT_PAD = 128  # lane-dense classifier width (true number of classes = 3)


# --------------------------------------------------------------------------- #
# Kernel
# --------------------------------------------------------------------------- #
def _repr_engine_kernel(h_ref, w1_ref, b1_ref, w2_ref, b2_ref, wc_ref, bc_ref,
                        aligned_ref, logits_ref):
    # h_ref: [TB, S, D] bf16 (or f32) tile of last_hidden_state.
    # Widen to f32 before pooling and take the mean in f32 in-kernel
    # (attention_mask intentionally ignored, matching `.mean(dim=1)`).
    inv_s = 1.0 / float(h_ref.shape[1])
    emb = jnp.sum(h_ref[...].astype(jnp.float32), axis=1) * inv_s   # [TB, D] f32

    # alignment: Linear(D->H) + ReLU   (bf16 MXU, f32 accumulate)
    z1 = jnp.dot(emb.astype(jnp.bfloat16), w1_ref[...],
                 preferred_element_type=jnp.float32) + b1_ref[...]
    z1 = jnp.maximum(z1, 0.0)

    # alignment: Linear(H->D) + ReLU
    aligned = jnp.dot(z1.astype(jnp.bfloat16), w2_ref[...],
                      preferred_element_type=jnp.float32) + b2_ref[...]
    aligned = jnp.maximum(aligned, 0.0)
    aligned_ref[...] = aligned.astype(aligned_ref.dtype)

    # classifier: Linear(D->3), lane-padded to 128 output lanes
    logits = jnp.dot(aligned.astype(jnp.bfloat16), wc_ref[...],
                     preferred_element_type=jnp.float32) + bc_ref[...]
    logits_ref[...] = logits.astype(logits_ref.dtype)


# --------------------------------------------------------------------------- #
# Tiling / generation-aware sizing
# --------------------------------------------------------------------------- #
def _round_up(x, m):
    return ((x + m - 1) // m) * m


def _tpu_generation_info():
    """Best-effort (VMEM capacity bytes, #TensorCores per chip)."""
    kind = ""
    try:
        kind = jax.devices()[0].device_kind.lower()
    except Exception:
        pass
    is_v7 = "v7" in kind
    vmem = None
    try:
        vmem = int(pltpu.get_tpu_info().vmem_capacity_bytes)
    except Exception:
        vmem = None
    if vmem is None:
        vmem = (64 << 20) if is_v7 else (128 << 20)   # v7x: 64 MiB; v5e/v6e: 128 MiB
    n_tc = 2 if is_v7 else 1
    return vmem, n_tc


def _pick_batch_tile(B, S, D, H, h_itemsize, aligned_itemsize):
    """VMEM-aware batch tile: fits 2x streamed h + weights + 2x outputs."""
    vmem_cap, n_tc = _tpu_generation_info()
    # ~96 MiB budget on 128-MiB chips (v5e/v6e), ~48 MiB on v7x's 64 MiB.
    budget = max(min(int(vmem_cap * 0.75), 100 << 20), 32 << 20)

    # VMEM-resident weights/biases (assume double-buffered, sublane-padded).
    weight_bytes = 2 * (D * H * 2 + H * D * 2 + D * LOGIT_PAD * 2
                        + 8 * H * 4 + 8 * D * 4 + 8 * LOGIT_PAD * 4)
    # Per-batch-row cost: streamed h (double-buffered) + both outputs
    # (double-buffered).
    row_bytes = 2 * S * D * h_itemsize + 2 * (D * aligned_itemsize + LOGIT_PAD * 4)

    avail = budget - weight_bytes - (4 << 20)          # slack for compiler scratch
    tb = max(avail // row_bytes, 16)
    tb = min(tb, 256)                                  # DMA / MXU sweet-spot cap
    if n_tc > 1:
        # Keep >= n_tc grid steps so the ("parallel",) batch axis can shard
        # across both TensorCores (v7x).
        tb = min(tb, _round_up(-(-B // n_tc), 16))
    if tb >= B:
        tb = B                                         # single full-array block
    else:
        tb = max(16, (tb // 16) * 16)                  # 16-row granularity (bf16 pack)
    return int(tb), int(budget)


# --------------------------------------------------------------------------- #
# Wrapper
# --------------------------------------------------------------------------- #
def representation_engine_forward(last_hidden_state, params,
                                  aligned_dtype=jnp.bfloat16):
    """last_hidden_state: [B, S, D] bf16 (preferred) or f32.
    Returns (aligned [B, D] (aligned_dtype), logits [B, 3] f32)."""
    B, S, D = last_hidden_state.shape
    H = params["w1"].shape[1]

    # ---- host-side parameter prep (tiny tensors) --------------------------
    w1 = params["w1"].astype(jnp.bfloat16)                        # [D, H]
    w2 = params["w2"].astype(jnp.bfloat16)                        # [H, D]
    wc = jnp.zeros((D, LOGIT_PAD), jnp.bfloat16).at[:, :3].set(
        params["wc"].astype(jnp.bfloat16))                        # [D, 128]
    bc = jnp.zeros((1, LOGIT_PAD), jnp.float32).at[:, :3].set(
        params["bc"].astype(jnp.float32))                         # [1, 128]
    b1 = params["b1"].astype(jnp.float32)                         # [1, H]
    b2 = params["b2"].astype(jnp.float32)                         # [1, D]

    # ---- batch tiling (no host-side pad of the big tensor) ----------------
    h_itemsize = jnp.dtype(last_hidden_state.dtype).itemsize
    a_itemsize = jnp.dtype(aligned_dtype).itemsize
    TB, vmem_limit = _pick_batch_tile(B, S, D, H, h_itemsize, a_itemsize)
    n_steps = pl.cdiv(B, TB)

    const2 = lambda i: (0, 0)   # weights / biases stay VMEM-resident

    aligned, logits_pad = pl.pallas_call(
        _repr_engine_kernel,
        out_shape=(
            jax.ShapeDtypeStruct((B, D), aligned_dtype),
            jax.ShapeDtypeStruct((B, LOGIT_PAD), jnp.float32),
        ),
        grid=(n_steps,),
        in_specs=[
            pl.BlockSpec((TB, S, D), lambda i: (i, 0, 0)),   # h tile (streamed)
            pl.BlockSpec((D, H), const2),                    # w1 (bf16, resident)
            pl.BlockSpec((1, H), const2),                    # b1
            pl.BlockSpec((H, D), const2),                    # w2 (bf16, resident)
            pl.BlockSpec((1, D), const2),                    # b2
            pl.BlockSpec((D, LOGIT_PAD), const2),            # wc (bf16, padded)
            pl.BlockSpec((1, LOGIT_PAD), const2),            # bc (padded)
        ],
        out_specs=(
            pl.BlockSpec((TB, D), lambda i: (i, 0)),
            pl.BlockSpec((TB, LOGIT_PAD), lambda i: (i, 0)),
        ),
        compiler_params=pltpu.CompilerParams(
            dimension_semantics=("parallel",),
            vmem_limit_bytes=vmem_limit,
        ),
    )(last_hidden_state, w1, b1, w2, b2, wc, bc)

    logits = logits_pad[:, :3]
    return aligned, logits


# --------------------------------------------------------------------------- #
# Synthetic "FinBERT" glue + params
# --------------------------------------------------------------------------- #
def init_params(key, input_dim=768, hidden_dim=256, vocab_size=128):
    """Deterministic synthetic parameters (weights stored as [in, out], f32)."""
    ks = jax.random.split(key, 8)
    scale = 0.02
    return {
        # synthetic token-embedding table standing in for the frozen BERT
        # encoder; stored in bf16 so the producer emits a bf16 hidden state
        # (halves the HBM stream into the kernel).
        "tok_emb": (scale * jax.random.normal(
            ks[0], (vocab_size, input_dim), jnp.float32)).astype(jnp.bfloat16),
        "w1": scale * jax.random.normal(ks[1], (input_dim, hidden_dim), jnp.float32),
        "b1": scale * jax.random.normal(ks[2], (1, hidden_dim), jnp.float32),
        "w2": scale * jax.random.normal(ks[3], (hidden_dim, input_dim), jnp.float32),
        "b2": scale * jax.random.normal(ks[4], (1, input_dim), jnp.float32),
        "wc": scale * jax.random.normal(ks[5], (input_dim, 3), jnp.float32),
        "bc": scale * jax.random.normal(ks[6], (1, 3), jnp.float32),
    }


def synthetic_bert_last_hidden_state(input_ids, attention_mask, params):
    """Plain-JAX glue standing in for the frozen FinBERT forward pass.

    Produces last_hidden_state [B, S, D] in bf16. attention_mask is accepted
    for API parity (in the original module it only affects the BERT internals,
    not the downstream mean-pool, which includes padding tokens just like
    .mean(dim=1))."""
    del attention_mask
    return params["tok_emb"][input_ids]  # gather: [B, S, D] bf16


# --------------------------------------------------------------------------- #
# Demo / self-check
# --------------------------------------------------------------------------- #
if __name__ == "__main__":
    B, S = 2, 8                # batch, sequence length
    INPUT_DIM, HIDDEN_DIM = 768, 256
    VOCAB = 128

    key = jax.random.PRNGKey(0)
    k_params, k_ids = jax.random.split(key)

    params = init_params(k_params, INPUT_DIM, HIDDEN_DIM, VOCAB)

    input_ids = jax.random.randint(k_ids, (B, S), 0, VOCAB, dtype=jnp.int32)
    attention_mask = jnp.ones((B, S), dtype=jnp.int32)

    last_hidden_state = synthetic_bert_last_hidden_state(input_ids, attention_mask, params)

    fwd = jax.jit(representation_engine_forward)
    aligned, logits = fwd(last_hidden_state, params)
    jax.block_until_ready((aligned, logits))

    # reference in plain JAX (f32, from the same bf16 hidden state)
    h32 = last_hidden_state.astype(jnp.float32)
    emb_ref = jnp.mean(h32, axis=1)
    z1_ref = jnp.maximum(emb_ref @ params["w1"] + params["b1"], 0.0)
    aligned_ref = jnp.maximum(z1_ref @ params["w2"] + params["b2"], 0.0)
    logits_ref = aligned_ref @ params["wc"] + params["bc"]

    assert aligned.shape == (B, INPUT_DIM) and logits.shape == (B, 3)
    # bf16 weights/activations/output with f32 accumulation -> small quant error
    aligned_f32 = aligned.astype(jnp.float32)
    assert jnp.allclose(aligned_f32, aligned_ref, atol=1e-2, rtol=5e-2), (
        float(jnp.max(jnp.abs(aligned_f32 - aligned_ref))))
    assert jnp.allclose(logits, logits_ref, atol=1e-2, rtol=5e-2), (
        float(jnp.max(jnp.abs(logits - logits_ref))))

    print("KERNEL_OK")
</pallas_src>

<mosaic_0001>
module attributes {stable_mosaic.version = 11 : i64} {
  func.func @_repr_engine_kernel(%arg0: i32, %arg1: memref<2x8x768xbf16, #tpu.memory_space<vmem>>, %arg2: memref<768x256xbf16, #tpu.memory_space<vmem>>, %arg3: memref<1x256xf32, #tpu.memory_space<vmem>>, %arg4: memref<256x768xbf16, #tpu.memory_space<vmem>>, %arg5: memref<1x768xf32, #tpu.memory_space<vmem>>, %arg6: memref<768x128xbf16, #tpu.memory_space<vmem>>, %arg7: memref<1x128xf32, #tpu.memory_space<vmem>>, %arg8: memref<2x768xbf16, #tpu.memory_space<vmem>>, %arg9: memref<2x128xf32, #tpu.memory_space<vmem>>) attributes {dimension_semantics = [#tpu.dimension_semantics<parallel>], iteration_bounds = array<i64: 1>, scalar_prefetch = 0 : i64, scratch_operands = 0 : i64, tpu.core_type = #tpu.core_type<tc>, window_params = [{transform_indices = @transform_0, window_bounds = array<i64: 2, 8, 768>}, {pipeline_mode = #tpu.pipeline_mode<synchronous>, transform_indices = @transform_1, window_bounds = array<i64: 768, 256>}, {pipeline_mode = #tpu.pipeline_mode<synchronous>, transform_indices = @transform_2, window_bounds = array<i64: 1, 256>}, {pipeline_mode = #tpu.pipeline_mode<synchronous>, transform_indices = @transform_3, window_bounds = array<i64: 256, 768>}, {pipeline_mode = #tpu.pipeline_mode<synchronous>, transform_indices = @transform_4, window_bounds = array<i64: 1, 768>}, {pipeline_mode = #tpu.pipeline_mode<synchronous>, transform_indices = @transform_5, window_bounds = array<i64: 768, 128>}, {pipeline_mode = #tpu.pipeline_mode<synchronous>, transform_indices = @transform_6, window_bounds = array<i64: 1, 128>}, {transform_indices = @transform_7, window_bounds = array<i64: 2, 768>}, {transform_indices = @transform_8, window_bounds = array<i64: 2, 128>}]} {
    %c0 = arith.constant 0 : index
    %c0_0 = arith.constant 0 : index
    %c0_1 = arith.constant 0 : index
    %0 = vector.load %arg1[%c0, %c0_0, %c0_1] : memref<2x8x768xbf16, #tpu.memory_space<vmem>>, vector<2x8x768xbf16>
    %1 = arith.extf %0 : vector<2x8x768xbf16> to vector<2x8x768xf32>
    %cst = arith.constant dense<0.000000e+00> : vector<2x768xf32>
    %2 = vector.multi_reduction <add>, %1, %cst [1] : vector<2x8x768xf32> to vector<2x768xf32>
    %cst_2 = arith.constant 1.250000e-01 : f32
    %3 = vector.broadcast %cst_2 : f32 to vector<2x768xf32>
    %4 = arith.mulf %2, %3 : vector<2x768xf32>
    %5 = arith.truncf %4 : vector<2x768xf32> to vector<2x768xbf16>
    %c0_3 = arith.constant 0 : index
    %c0_4 = arith.constant 0 : index
    %6 = vector.load %arg2[%c0_3, %c0_4] : memref<768x256xbf16, #tpu.memory_space<vmem>>, vector<768x256xbf16>
    %cst_5 = arith.constant dense<0.000000e+00> : vector<2x256xf32>
    %7 = tpu.matmul %5, %6, %cst_5 {dimension_numbers = #tpu.dot_dimension_numbers<[1], [0], [0], [1], [0, 0, 1, 1], [], []>} : vector<2x768xbf16>, vector<768x256xbf16>, vector<2x256xf32> -> vector<2x256xf32>
    %c0_6 = arith.constant 0 : index
    %c0_7 = arith.constant 0 : index
    %8 = vector.load %arg3[%c0_6, %c0_7] : memref<1x256xf32, #tpu.memory_space<vmem>>, vector<1x256xf32>
    %9 = vector.broadcast %8 : vector<1x256xf32> to vector<2x256xf32>
    %10 = arith.addf %7, %9 : vector<2x256xf32>
    %cst_8 = arith.constant 0.000000e+00 : f32
    %11 = vector.broadcast %cst_8 : f32 to vector<2x256xf32>
    %12 = arith.maximumf %10, %11 : vector<2x256xf32>
    %13 = arith.truncf %12 : vector<2x256xf32> to vector<2x256xbf16>
    %c0_9 = arith.constant 0 : index
    %c0_10 = arith.constant 0 : index
    %14 = vector.load %arg4[%c0_9, %c0_10] : memref<256x768xbf16, #tpu.memory_space<vmem>>, vector<256x768xbf16>
    %cst_11 = arith.constant dense<0.000000e+00> : vector<2x768xf32>
    %15 = tpu.matmul %13, %14, %cst_11 {dimension_numbers = #tpu.dot_dimension_numbers<[1], [0], [0], [1], [0, 0, 1, 1], [], []>} : vector<2x256xbf16>, vector<256x768xbf16>, vector<2x768xf32> -> vector<2x768xf32>
    %c0_12 = arith.constant 0 : index
    %c0_13 = arith.constant 0 : index
    %16 = vector.load %arg5[%c0_12, %c0_13] : memref<1x768xf32, #tpu.memory_space<vmem>>, vector<1x768xf32>
    %17 = vector.broadcast %16 : vector<1x768xf32> to vector<2x768xf32>
    %18 = arith.addf %15, %17 : vector<2x768xf32>
    %cst_14 = arith.constant 0.000000e+00 : f32
    %19 = vector.broadcast %cst_14 : f32 to vector<2x768xf32>
    %20 = arith.maximumf %18, %19 : vector<2x768xf32>
    %21 = arith.truncf %20 : vector<2x768xf32> to vector<2x768xbf16>
    %c0_15 = arith.constant 0 : index
    %c0_16 = arith.constant 0 : index
    %22 = vector.load %arg8[%c0_15, %c0_16] : memref<2x768xbf16, #tpu.memory_space<vmem>>, vector<2x768xbf16>
    tpu.vector_store %arg8[%c0_15, %c0_16], %21 {strides = array<i32>} : memref<2x768xbf16, #tpu.memory_space<vmem>>, vector<2x768xbf16>,
    %23 = arith.truncf %20 : vector<2x768xf32> to vector<2x768xbf16>
    %c0_17 = arith.constant 0 : index
    %c0_18 = arith.constant 0 : index
    %24 = vector.load %arg6[%c0_17, %c0_18] : memref<768x128xbf16, #tpu.memory_space<vmem>>, vector<768x128xbf16>
    %cst_19 = arith.constant dense<0.000000e+00> : vector<2x128xf32>
    %25 = tpu.matmul %23, %24, %cst_19 {dimension_numbers = #tpu.dot_dimension_numbers<[1], [0], [0], [1], [0, 0, 1, 1], [], []>} : vector<2x768xbf16>, vector<768x128xbf16>, vector<2x128xf32> -> vector<2x128xf32>
    %c0_20 = arith.constant 0 : index
    %c0_21 = arith.constant 0 : index
    %26 = vector.load %arg7[%c0_20, %c0_21] : memref<1x128xf32, #tpu.memory_space<vmem>>, vector<1x128xf32>
    %27 = vector.broadcast %26 : vector<1x128xf32> to vector<2x128xf32>
    %28 = arith.addf %25, %27 : vector<2x128xf32>
    %c0_22 = arith.constant 0 : index
    %c0_23 = arith.constant 0 : index
    %29 = vector.load %arg9[%c0_22, %c0_23] : memref<2x128xf32, #tpu.memory_space<vmem>>, vector<2x128xf32>
    tpu.vector_store %arg9[%c0_22, %c0_23], %28 {strides = array<i32>} : memref<2x128xf32, #tpu.memory_space<vmem>>, vector<2x128xf32>,
    return
  }
  func.func @transform_0(%arg0: i32) -> (i32, i32, i32) {
    %c0_i32 = arith.constant 0 : i32
    %c0_i32_0 = arith.constant 0 : i32
    %c0_i32_1 = arith.constant 0 : i32
    return %arg0, %c0_i32, %c0_i32_0 : i32, i32, i32
  }
  func.func @transform_1(%arg0: i32) -> (i32, i32) {
    %c0_i32 = arith.constant 0 : i32
    %c0_i32_0 = arith.constant 0 : i32
    %c0_i32_1 = arith.constant 0 : i32
    return %c0_i32, %c0_i32_0 : i32, i32
  }
  func.func @transform_2(%arg0: i32) -> (i32, i32) {
    %c0_i32 = arith.constant 0 : i32
    %c0_i32_0 = arith.constant 0 : i32
    %c0_i32_1 = arith.constant 0 : i32
    return %c0_i32, %c0_i32_0 : i32, i32
  }
  func.func @transform_3(%arg0: i32) -> (i32, i32) {
    %c0_i32 = arith.constant 0 : i32
    %c0_i32_0 = arith.constant 0 : i32
    %c0_i32_1 = arith.constant 0 : i32
    return %c0_i32, %c0_i32_0 : i32, i32
  }
  func.func @transform_4(%arg0: i32) -> (i32, i32) {
    %c0_i32 = arith.constant 0 : i32
    %c0_i32_0 = arith.constant 0 : i32
    %c0_i32_1 = arith.constant 0 : i32
    return %c0_i32, %c0_i32_0 : i32, i32
  }
  func.func @transform_5(%arg0: i32) -> (i32, i32) {
    %c0_i32 = arith.constant 0 : i32
    %c0_i32_0 = arith.constant 0 : i32
    %c0_i32_1 = arith.constant 0 : i32
    return %c0_i32, %c0_i32_0 : i32, i32
  }
  func.func @transform_6(%arg0: i32) -> (i32, i32) {
    %c0_i32 = arith.constant 0 : i32
    %c0_i32_0 = arith.constant 0 : i32
    %c0_i32_1 = arith.constant 0 : i32
    return %c0_i32, %c0_i32_0 : i32, i32
  }
  func.func @transform_7(%arg0: i32) -> (i32, i32) {
    %c0_i32 = arith.constant 0 : i32
    %c0_i32_0 = arith.constant 0 : i32
    return %arg0, %c0_i32 : i32, i32
  }
  func.func @transform_8(%arg0: i32) -> (i32, i32) {
    %c0_i32 = arith.constant 0 : i32
    %c0_i32_0 = arith.constant 0 : i32
    return %arg0, %c0_i32 : i32, i32
  }
}

</mosaic_0001>

<llo_original>
// kernel: representation_engine_forward.1
$region0: #{representation_engine_forward.1}
  #allocation0 [shape = 'u32[]', space=smem, size = 0x4, offset = 0x4, fixed_abs, tag = 'smem constant byte address 0x4 - core index']
  #allocation1 [shape = 'u32[144,128]{1,0:T(1,128)}', space=vmem, size = 0x12000, scoped, tag = 'internal scratch']
  %s0 = inlined_call_operand.vmem [shape: bf16[2,8,768], index: 0, kind: input, shape index: {}]
  %s1 = inlined_call_operand.vmem [shape: bf16[768,256], index: 1, kind: input, shape index: {}]
  %s2 = inlined_call_operand.vmem [shape: f32[1,256], index: 2, kind: input, shape index: {}]
  %s3 = inlined_call_operand.vmem [shape: bf16[256,768], index: 3, kind: input, shape index: {}]
  %s4 = inlined_call_operand.vmem [shape: f32[1,768], index: 4, kind: input, shape index: {}]
  %s5 = inlined_call_operand.vmem [shape: bf16[768,128], index: 5, kind: input, shape index: {}]
  %s6 = inlined_call_operand.vmem [shape: f32[1,128], index: 6, kind: input, shape index: {}]
  %s7 = inlined_call_operand.hbm [shape: bf16[2,768], index: 7, kind: output, shape index: {0}]
  %s8 = inlined_call_operand.hbm [shape: f32[2,128], index: 8, kind: output, shape index: {1}]
  %9 = xla_tuple %s7, %s8
  %s10 = sld [smem:[#allocation0]]
  $region46: #{representation_engine_forward.1} parent=0
    _
  %s12 = ssub.s32 1, %s10
  %s13 = scalar_select 0, %s12, %s10
  $region1: #{representation_engine_forward.1} parent=0
    #allocation2 [shape = 'u8[3072]{0}', space=vmem, size = 0xc00, scoped, tag = 'output window, operand 0, single buffered']
    #allocation3 [shape = 's32[1]{0}', space=sflag, size = 0x4, scoped, tag = 'scoped memory for representation_engine_forward.1']
    #allocation4 [shape = 'u8[1024]{0}', space=vmem, size = 0x400, scoped, tag = 'output window, operand 1, single buffered']
    #allocation5 [shape = 's32[1]{0}', space=sflag, size = 0x4, scoped, tag = 'scoped memory for representation_engine_forward.1']
    %14 = vsyncpa [#allocation3], 0
    %15 = vsyncpa [#allocation5], 0
    // Predicated region
    $region2: #{representation_engine_forward.1} parent=1 // pred_check
      _
    $region3: #{representation_engine_forward.1} parent=1 // pred_check_branch
      %17 = sbr.rel (0) target = $region5
    $region4: #{representation_engine_forward.1} parent=1 // pred_region
      _
    $region5: #{representation_engine_forward.1} parent=1 // pred_fallthru
      _
    // Predicated region
    $region6: #{representation_engine_forward.1} parent=1 // pred_check
      _
    $region7: #{representation_engine_forward.1} parent=1 // pred_check_branch
      %19 = sbr.rel (0) target = $region9
    $region8: #{representation_engine_forward.1} parent=1 // pred_region
      _
    $region9: #{representation_engine_forward.1} parent=1 // pred_fallthru
      _
    // Predicated region
    $region10: #{representation_engine_forward.1} parent=1 // pred_check
      _
    $region11: #{representation_engine_forward.1} parent=1 // pred_check_branch
      %21 = sbr.rel (0) target = $region13
    $region12: #{representation_engine_forward.1} parent=1 // pred_region
      _
    $region13: #{representation_engine_forward.1} parent=1 // pred_fallthru
      _
    // Predicated region
    $region14: #{representation_engine_forward.1} parent=1 // pred_check
      _
    $region15: #{representation_engine_forward.1} parent=1 // pred_check_branch
      %23 = sbr.rel (0) target = $region17
    $region16: #{representation_engine_forward.1} parent=1 // pred_region
      _
    $region17: #{representation_engine_forward.1} parent=1 // pred_fallthru
      _
    // Predicated region
    $region18: #{representation_engine_forward.1} parent=1 // pred_check
      _
    $region19: #{representation_engine_forward.1} parent=1 // pred_check_branch
      %25 = sbr.rel (0) target = $region21
    $region20: #{representation_engine_forward.1} parent=1 // pred_region
      _
    $region21: #{representation_engine_forward.1} parent=1 // pred_fallthru
      _
    // Predicated region
    $region22: #{representation_engine_forward.1} parent=1 // pred_check
      _
    $region23: #{representation_engine_forward.1} parent=1 // pred_check_branch
      %27 = sbr.rel (0) target = $region25
    $region24: #{representation_engine_forward.1} parent=1 // pred_region
      _
    $region25: #{representation_engine_forward.1} parent=1 // pred_fallthru
      _
    // Predicated region
    $region26: #{representation_engine_forward.1} parent=1 // pred_check
      _
    $region27: #{representation_engine_forward.1} parent=1 // pred_check_branch
      %29 = sbr.rel (0) target = $region29
    $region28: #{representation_engine_forward.1} parent=1 // pred_region
      _
    $region29: #{representation_engine_forward.1} parent=1 // pred_fallthru
      _
    %v31 = vld [vmem:[%s0] sm:$0xff]
    %v32 = vld [vmem:[%s0 + $0x8] sm:$0xff]
    %v33 = vld [vmem:[%s0 + $0x10] sm:$0xff]
    %v34 = vld [vmem:[%s0 + $0x18] sm:$0xff]
    %v35 = vld [vmem:[%s0 + $0x20] sm:$0xff]
    %v36 = vld [vmem:[%s0 + $0x28] sm:$0xff]
    %v37 = vunpack.c.l.bf16 %v31
    %v38 = vunpack.c.h.bf16 %v31
    %v39 = vunpack.c.l.bf16 %v32
    %v40 = vunpack.c.h.bf16 %v32
    %v41 = vunpack.c.l.bf16 %v33
    %v42 = vunpack.c.h.bf16 %v33
    %v43 = vunpack.c.l.bf16 %v34
    %v44 = vunpack.c.h.bf16 %v34
    %v45 = vunpack.c.l.bf16 %v35
    %v46 = vunpack.c.h.bf16 %v35
    %v47 = vunpack.c.l.bf16 %v36
    %v48 = vunpack.c.h.bf16 %v36
    %v49 = vrot.slane %v37, 4
    %v50 = vadd.f32 %v37, %v49
    %v51 = vrot.slane %v50, 2
    %v52 = vadd.f32 %v50, %v51
    %v53 = vrot.slane %v52, 1
    %v54 = vadd.f32 %v52, %v53
    %v55 = vrot.slane %v38, 4
    %v56 = vadd.f32 %v38, %v55
    %v57 = vrot.slane %v56, 2
    %v58 = vadd.f32 %v56, %v57
    %v59 = vrot.slane %v58, 1
    %v60 = vadd.f32 %v58, %v59
    %v61 = vrot.slane %v39, 4
    %v62 = vadd.f32 %v39, %v61
    %v63 = vrot.slane %v62, 2
    %v64 = vadd.f32 %v62, %v63
    %v65 = vrot.slane %v64, 1
    %v66 = vadd.f32 %v64, %v65
    %v67 = vrot.slane %v40, 4
    %v68 = vadd.f32 %v40, %v67
    %v69 = vrot.slane %v68, 2
    %v70 = vadd.f32 %v68, %v69
    %v71 = vrot.slane %v70, 1
    %v72 = vadd.f32 %v70, %v71
    %v73 = vrot.slane %v41, 4
    %v74 = vadd.f32 %v41, %v73
    %v75 = vrot.slane %v74, 2
    %v76 = vadd.f32 %v74, %v75
    %v77 = vrot.slane %v76, 1
    %v78 = vadd.f32 %v76, %v77
    %v79 = vrot.slane %v42, 4
    %v80 = vadd.f32 %v42, %v79
    %v81 = vrot.slane %v80, 2
    %v82 = vadd.f32 %v80, %v81
    %v83 = vrot.slane %v82, 1
    %v84 = vadd.f32 %v82, %v83
    %v85 = vrot.slane %v43, 4
    %v86 = vadd.f32 %v43, %v85
    %v87 = vrot.slane %v86, 2
    %v88 = vadd.f32 %v86, %v87
    %v89 = vrot.slane %v88, 1
    %v90 = vadd.f32 %v88, %v89
    %v91 = vrot.slane %v44, 4
    %v92 = vadd.f32 %v44, %v91
    %v93 = vrot.slane %v92, 2
    %v94 = vadd.f32 %v92, %v93
    %v95 = vrot.slane %v94, 1
    %v96 = vadd.f32 %v94, %v95
    %v97 = vrot.slane %v45, 4
    %v98 = vadd.f32 %v45, %v97
    %v99 = vrot.slane %v98, 2
    %v100 = vadd.f32 %v98, %v99
    %v101 = vrot.slane %v100, 1
    %v102 = vadd.f32 %v100, %v101
    %v103 = vrot.slane %v46, 4
    %v104 = vadd.f32 %v46, %v103
    %v105 = vrot.slane %v104, 2
    %v106 = vadd.f32 %v104, %v105
    %v107 = vrot.slane %v106, 1
    %v108 = vadd.f32 %v106, %v107
    %v109 = vrot.slane %v47, 4
    %v110 = vadd.f32 %v47, %v109
    %v111 = vrot.slane %v110, 2
    %v112 = vadd.f32 %v110, %v111
    %v113 = vrot.slane %v112, 1
    %v114 = vadd.f32 %v112, %v113
    %v115 = vrot.slane %v48, 4
    %v116 = vadd.f32 %v48, %v115
    %v117 = vrot.slane %v116, 2
    %v118 = vadd.f32 %v116, %v117
    %v119 = vrot.slane %v118, 1
    %v120 = vadd.f32 %v118, %v119
    %v121 = vmul.f32 %v54, 0.125
    %v122 = vmul.f32 %v60, 0.125
    %v123 = vmul.f32 %v66, 0.125
    %v124 = vmul.f32 %v72, 0.125
    %v125 = vmul.f32 %v78, 0.125
    %v126 = vmul.f32 %v84, 0.125
    %v127 = vmul.f32 %v90, 0.125
    %v128 = vmul.f32 %v96, 0.125
    %v129 = vmul.f32 %v102, 0.125
    %v130 = vmul.f32 %v108, 0.125
    %v131 = vmul.f32 %v114, 0.125
    %v132 = vmul.f32 %v120, 0.125
    %v133 = vpack.c.bf16 %v121, %v121
    %v134 = vpack.c.bf16 %v122, %v122
    %v135 = vpack.c.bf16 %v123, %v123
    %v136 = vpack.c.bf16 %v124, %v124
    %v137 = vpack.c.bf16 %v125, %v125
    %v138 = vpack.c.bf16 %v126, %v126
    %v139 = vpack.c.bf16 %v127, %v127
    %v140 = vpack.c.bf16 %v128, %v128
    %v141 = vpack.c.bf16 %v129, %v129
    %v142 = vpack.c.bf16 %v130, %v130
    %v143 = vpack.c.bf16 %v131, %v131
    %v144 = vpack.c.bf16 %v132, %v132
    %v145 = vld [vmem:[%s1] sm:$0xff]
    %v146 = vld [vmem:[%s1 + $0x8] sm:$0xff]
    %v147 = vld [vmem:[%s1 + $0x10] sm:$0xff]
    %v148 = vld [vmem:[%s1 + $0x18] sm:$0xff]
    %v149 = vld [vmem:[%s1 + $0x20] sm:$0xff]
    %v150 = vld [vmem:[%s1 + $0x28] sm:$0xff]
    %v151 = vld [vmem:[%s1 + $0x30] sm:$0xff]
    %v152 = vld [vmem:[%s1 + $0x38] sm:$0xff]
    %v153 = vld [vmem:[%s1 + $0x40] sm:$0xff]
    %v154 = vld [vmem:[%s1 + $0x48] sm:$0xff]
    %v155 = vld [vmem:[%s1 + $0x50] sm:$0xff]
    %v156 = vld [vmem:[%s1 + $0x58] sm:$0xff]
    %v157 = vld [vmem:[%s1 + $0x60] sm:$0xff]
    %v158 = vld [vmem:[%s1 + $0x68] sm:$0xff]
    %v159 = vld [vmem:[%s1 + $0x70] sm:$0xff]
    %v160 = vld [vmem:[%s1 + $0x78] sm:$0xff]
    %v161 = vld [vmem:[%s1 + $0x80] sm:$0xff]
    %v162 = vld [vmem:[%s1 + $0x88] sm:$0xff]
    %v163 = vld [vmem:[%s1 + $0x90] sm:$0xff]
    %v164 = vld [vmem:[%s1 + $0x98] sm:$0xff]
    %v165 = vld [vmem:[%s1 + $0xa0] sm:$0xff]
    %v166 = vld [vmem:[%s1 + $0xa8] sm:$0xff]
    %v167 = vld [vmem:[%s1 + $0xb0] sm:$0xff]
    %v168 = vld [vmem:[%s1 + $0xb8] sm:$0xff]
    %v169 = vld [vmem:[%s1 + $0xc0] sm:$0xff]
    %v170 = vld [vmem:[%s1 + $0xc8] sm:$0xff]
    %v171 = vld [vmem:[%s1 + $0xd0] sm:$0xff]
    %v172 = vld [vmem:[%s1 + $0xd8] sm:$0xff]
    %v173 = vld [vmem:[%s1 + $0xe0] sm:$0xff]
    %v174 = vld [vmem:[%s1 + $0xe8] sm:$0xff]
    %v175 = vld [vmem:[%s1 + $0xf0] sm:$0xff]
    %v176 = vld [vmem:[%s1 + $0xf8] sm:$0xff]
    %v177 = vld [vmem:[%s1 + $0x100] sm:$0xff]
    %v178 = vld [vmem:[%s1 + $0x108] sm:$0xff]
    %v179 = vld [vmem:[%s1 + $0x110] sm:$0xff]
    %v180 = vld [vmem:[%s1 + $0x118] sm:$0xff]
    %v181 = vld [vmem:[%s1 + $0x120] sm:$0xff]
    %v182 = vld [vmem:[%s1 + $0x128] sm:$0xff]
    %v183 = vld [vmem:[%s1 + $0x130] sm:$0xff]
    %v184 = vld [vmem:[%s1 + $0x138] sm:$0xff]
    %v185 = vld [vmem:[%s1 + $0x140] sm:$0xff]
    %v186 = vld [vmem:[%s1 + $0x148] sm:$0xff]
    %v187 = vld [vmem:[%s1 + $0x150] sm:$0xff]
    %v188 = vld [vmem:[%s1 + $0x158] sm:$0xff]
    %v189 = vld [vmem:[%s1 + $0x160] sm:$0xff]
    %v190 = vld [vmem:[%s1 + $0x168] sm:$0xff]
    %v191 = vld [vmem:[%s1 + $0x170] sm:$0xff]
    %v192 = vld [vmem:[%s1 + $0x178] sm:$0xff]
    %v193 = vld [vmem:[%s1 + $0x180] sm:$0xff]
    %v194 = vld [vmem:[%s1 + $0x188] sm:$0xff]
    %v195 = vld [vmem:[%s1 + $0x190] sm:$0xff]
    %v196 = vld [vmem:[%s1 + $0x198] sm:$0xff]
    %v197 = vld [vmem:[%s1 + $0x1a0] sm:$0xff]
    %v198 = vld [vmem:[%s1 + $0x1a8] sm:$0xff]
    %v199 = vld [vmem:[%s1 + $0x1b0] sm:$0xff]
    %v200 = vld [vmem:[%s1 + $0x1b8] sm:$0xff]
    %v201 = vld [vmem:[%s1 + $0x1c0] sm:$0xff]
    %v202 = vld [vmem:[%s1 + $0x1c8] sm:$0xff]
    %v203 = vld [vmem:[%s1 + $0x1d0] sm:$0xff]
    %v204 = vld [vmem:[%s1 + $0x1d8] sm:$0xff]
    %v205 = vld [vmem:[%s1 + $0x1e0] sm:$0xff]
    %v206 = vld [vmem:[%s1 + $0x1e8] sm:$0xff]
    %v207 = vld [vmem:[%s1 + $0x1f0] sm:$0xff]
    %v208 = vld [vmem:[%s1 + $0x1f8] sm:$0xff]
    %v209 = vld [vmem:[%s1 + $0x200] sm:$0xff]
    %v210 = vld [vmem:[%s1 + $0x208] sm:$0xff]
    %v211 = vld [vmem:[%s1 + $0x210] sm:$0xff]
    %v212 = vld [vmem:[%s1 + $0x218] sm:$0xff]
    %v213 = vld [vmem:[%s1 + $0x220] sm:$0xff]
    %v214 = vld [vmem:[%s1 + $0x228] sm:$0xff]
    %v215 = vld [vmem:[%s1 + $0x230] sm:$0xff]
    %v216 = vld [vmem:[%s1 + $0x238] sm:$0xff]
    %v217 = vld [vmem:[%s1 + $0x240] sm:$0xff]
    %v218 = vld [vmem:[%s1 + $0x248] sm:$0xff]
    %v219 = vld [vmem:[%s1 + $0x250] sm:$0xff]
    %v220 = vld [vmem:[%s1 + $0x258] sm:$0xff]
    %v221 = vld [vmem:[%s1 + $0x260] sm:$0xff]
    %v222 = vld [vmem:[%s1 + $0x268] sm:$0xff]
    %v223 = vld [vmem:[%s1 + $0x270] sm:$0xff]
    %v224 = vld [vmem:[%s1 + $0x278] sm:$0xff]
    %v225 = vld [vmem:[%s1 + $0x280] sm:$0xff]
    %v226 = vld [vmem:[%s1 + $0x288] sm:$0xff]
    %v227 = vld [vmem:[%s1 + $0x290] sm:$0xff]
    %v228 = vld [vmem:[%s1 + $0x298] sm:$0xff]
    %v229 = vld [vmem:[%s1 + $0x2a0] sm:$0xff]
    %v230 = vld [vmem:[%s1 + $0x2a8] sm:$0xff]
    %v231 = vld [vmem:[%s1 + $0x2b0] sm:$0xff]
    %v232 = vld [vmem:[%s1 + $0x2b8] sm:$0xff]
    %v233 = vld [vmem:[%s1 + $0x2c0] sm:$0xff]
    %v234 = vld [vmem:[%s1 + $0x2c8] sm:$0xff]
    %v235 = vld [vmem:[%s1 + $0x2d0] sm:$0xff]
    %v236 = vld [vmem:[%s1 + $0x2d8] sm:$0xff]
    %v237 = vld [vmem:[%s1 + $0x2e0] sm:$0xff]
    %v238 = vld [vmem:[%s1 + $0x2e8] sm:$0xff]
    %v239 = vld [vmem:[%s1 + $0x2f0] sm:$0xff]
    %v240 = vld [vmem:[%s1 + $0x2f8] sm:$0xff]
    %v241 = vld [vmem:[%s2] sm:$0x3]
    %v243 = vlaneseq
    %v244 = vshrl.u32 %v243, 7
    %v245 = vsub.s32 0, %v244
    %v246 = vrot.slane %v241, %v245
    %v247 = vlaneseq
    %v248 = vshrl.u32 %v247, 7
    %v249 = vsub.s32 1, %v248
    %v250 = vrot.slane %v241, %v249
    %v265 = vunpack.c.l.b16 %v133
    %v266 = vunpack.c.l.b16 %v134
    %v267 = vunpack.c.l.b16 %v135
    %v268 = vunpack.c.l.b16 %v136
    %v269 = vunpack.c.l.b16 %v137
    %v270 = vunpack.c.l.b16 %v138
    %v271 = vunpack.c.l.b16 %v139
    %v272 = vunpack.c.l.b16 %v140
    %v273 = vunpack.c.l.b16 %v141
    %v274 = vunpack.c.l.b16 %v142
    %v275 = vunpack.c.l.b16 %v143
    %v276 = vunpack.c.l.b16 %v144
    %vm277 = vcmask 1041409
    %v278 = vsel %vm277, %v271, %v265
    %v279 = vsel %vm277, %v272, %v266
    %v280 = vsel %vm277, %v273, %v267
    %v281 = vsel %vm277, %v274, %v268
    %v282 = vsel %vm277, %v275, %v269
    %v283 = vsel %vm277, %v276, %v270
    %v284 = vpack.c.b16 %v278, %v278
    %v285 = vpack.c.b16 %v279, %v279
    %v286 = vpack.c.b16 %v280, %v280
    %v287 = vpack.c.b16 %v281, %v281
    %v288 = vpack.c.b16 %v282, %v282
    %v289 = vpack.c.b16 %v283, %v283
    %v392 = vunpack.c.l.b16 %v145
    %v393 = vunpack.c.h.b16 %v145
    %v394 = vunpack.c.l.b16 %v146
    %v395 = vunpack.c.h.b16 %v146
    %v396 = vunpack.c.l.b16 %v147
    %v397 = vunpack.c.h.b16 %v147
    %v398 = vunpack.c.l.b16 %v148
    %v399 = vunpack.c.h.b16 %v148
    %v400 = vunpack.c.l.b16 %v149
    %v401 = vunpack.c.h.b16 %v149
    %v402 = vunpack.c.l.b16 %v150
    %v403 = vunpack.c.h.b16 %v150
    %v404 = vunpack.c.l.b16 %v151
    %v405 = vunpack.c.h.b16 %v151
    %v406 = vunpack.c.l.b16 %v152
    %v407 = vunpack.c.h.b16 %v152
    %v408 = vunpack.c.l.b16 %v153
    %v409 = vunpack.c.h.b16 %v153
    %v410 = vunpack.c.l.b16 %v154
    %v411 = vunpack.c.h.b16 %v154
    %v412 = vunpack.c.l.b16 %v155
    %v413 = vunpack.c.h.b16 %v155
    %v414 = vunpack.c.l.b16 %v156
    %v415 = vunpack.c.h.b16 %v156
    %v416 = vunpack.c.l.b16 %v157
    %v417 = vunpack.c.h.b16 %v157
    %v418 = vunpack.c.l.b16 %v158
    %v419 = vunpack.c.h.b16 %v158
    %v420 = vunpack.c.l.b16 %v159
    %v421 = vunpack.c.h.b16 %v159
    %v422 = vunpack.c.l.b16 %v160
    %v423 = vunpack.c.h.b16 %v160
    %v424 = vunpack.c.l.b16 %v161
    %v425 = vunpack.c.h.b16 %v161
    %v426 = vunpack.c.l.b16 %v162
    %v427 = vunpack.c.h.b16 %v162
    %v428 = vunpack.c.l.b16 %v163
    %v429 = vunpack.c.h.b16 %v163
    %v430 = vunpack.c.l.b16 %v164
    %v431 = vunpack.c.h.b16 %v164
    %v432 = vunpack.c.l.b16 %v165
    %v433 = vunpack.c.h.b16 %v165
    %v434 = vunpack.c.l.b16 %v166
    %v435 = vunpack.c.h.b16 %v166
    %v436 = vunpack.c.l.b16 %v167
    %v437 = vunpack.c.h.b16 %v167
    %v438 = vunpack.c.l.b16 %v168
    %v439 = vunpack.c.h.b16 %v168
    %v440 = vunpack.c.l.b16 %v169
    %v441 = vunpack.c.h.b16 %v169
    %v442 = vunpack.c.l.b16 %v170
    %v443 = vunpack.c.h.b16 %v170
    %v444 = vunpack.c.l.b16 %v171
    %v445 = vunpack.c.h.b16 %v171
    %v446 = vunpack.c.l.b16 %v172
    %v447 = vunpack.c.h.b16 %v172
    %v448 = vunpack.c.l.b16 %v173
    %v449 = vunpack.c.h.b16 %v173
    %v450 = vunpack.c.l.b16 %v174
    %v451 = vunpack.c.h.b16 %v174
    %v452 = vunpack.c.l.b16 %v175
    %v453 = vunpack.c.h.b16 %v175
    %v454 = vunpack.c.l.b16 %v176
    %v455 = vunpack.c.h.b16 %v176
    %v456 = vunpack.c.l.b16 %v177
    %v457 = vunpack.c.h.b16 %v177
    %v458 = vunpack.c.l.b16 %v178
    %v459 = vunpack.c.h.b16 %v178
    %v460 = vunpack.c.l.b16 %v179
    %v461 = vunpack.c.h.b16 %v179
    %v462 = vunpack.c.l.b16 %v180
    %v463 = vunpack.c.h.b16 %v180
    %v464 = vunpack.c.l.b16 %v181
    %v465 = vunpack.c.h.b16 %v181
    %v466 = vunpack.c.l.b16 %v182
    %v467 = vunpack.c.h.b16 %v182
    %v468 = vunpack.c.l.b16 %v183
    %v469 = vunpack.c.h.b16 %v183
    %v470 = vunpack.c.l.b16 %v184
    %v471 = vunpack.c.h.b16 %v184
    %v472 = vunpack.c.l.b16 %v185
    %v473 = vunpack.c.h.b16 %v185
    %v474 = vunpack.c.l.b16 %v186
    %v475 = vunpack.c.h.b16 %v186
    %v476 = vunpack.c.l.b16 %v187
    %v477 = vunpack.c.h.b16 %v187
    %v478 = vunpack.c.l.b16 %v188
    %v479 = vunpack.c.h.b16 %v188
    %v480 = vunpack.c.l.b16 %v189
    %v481 = vunpack.c.h.b16 %v189
    %v482 = vunpack.c.l.b16 %v190
    %v483 = vunpack.c.h.b16 %v190
    %v484 = vunpack.c.l.b16 %v191
    %v485 = vunpack.c.h.b16 %v191
    %v486 = vunpack.c.l.b16 %v192
    %v487 = vunpack.c.h.b16 %v192
    %v488 = vunpack.c.l.b16 %v193
    %v489 = vunpack.c.h.b16 %v193
    %v490 = vunpack.c.l.b16 %v194
    %v491 = vunpack.c.h.b16 %v194
    %v492 = vunpack.c.l.b16 %v195
    %v493 = vunpack.c.h.b16 %v195
    %v494 = vunpack.c.l.b16 %v196
    %v495 = vunpack.c.h.b16 %v196
    %v496 = vunpack.c.l.b16 %v197
    %v497 = vunpack.c.h.b16 %v197
    %v498 = vunpack.c.l.b16 %v198
    %v499 = vunpack.c.h.b16 %v198
    %v500 = vunpack.c.l.b16 %v199
    %v501 = vunpack.c.h.b16 %v199
    %v502 = vunpack.c.l.b16 %v200
    %v503 = vunpack.c.h.b16 %v200
    %v504 = vunpack.c.l.b16 %v201
    %v505 = vunpack.c.h.b16 %v201
    %v506 = vunpack.c.l.b16 %v202
    %v507 = vunpack.c.h.b16 %v202
    %v508 = vunpack.c.l.b16 %v203
    %v509 = vunpack.c.h.b16 %v203
    %v510 = vunpack.c.l.b16 %v204
    %v511 = vunpack.c.h.b16 %v204
    %v512 = vunpack.c.l.b16 %v205
    %v513 = vunpack.c.h.b16 %v205
    %v514 = vunpack.c.l.b16 %v206
    %v515 = vunpack.c.h.b16 %v206
    %v516 = vunpack.c.l.b16 %v207
    %v517 = vunpack.c.h.b16 %v207
    %v518 = vunpack.c.l.b16 %v208
    %v519 = vunpack.c.h.b16 %v208
    %v520 = vunpack.c.l.b16 %v209
    %v521 = vunpack.c.h.b16 %v209
    %v522 = vunpack.c.l.b16 %v210
    %v523 = vunpack.c.h.b16 %v210
    %v524 = vunpack.c.l.b16 %v211
    %v525 = vunpack.c.h.b16 %v211
    %v526 = vunpack.c.l.b16 %v212
    %v527 = vunpack.c.h.b16 %v212
    %v528 = vunpack.c.l.b16 %v213
    %v529 = vunpack.c.h.b16 %v213
    %v530 = vunpack.c.l.b16 %v214
    %v531 = vunpack.c.h.b16 %v214
    %v532 = vunpack.c.l.b16 %v215
    %v533 = vunpack.c.h.b16 %v215
    %v534 = vunpack.c.l.b16 %v216
    %v535 = vunpack.c.h.b16 %v216
    %v536 = vunpack.c.l.b16 %v217
    %v537 = vunpack.c.h.b16 %v217
    %v538 = vunpack.c.l.b16 %v218
    %v539 = vunpack.c.h.b16 %v218
    %v540 = vunpack.c.l.b16 %v219
    %v541 = vunpack.c.h.b16 %v219
    %v542 = vunpack.c.l.b16 %v220
    %v543 = vunpack.c.h.b16 %v220
    %v544 = vunpack.c.l.b16 %v221
    %v545 = vunpack.c.h.b16 %v221
    %v546 = vunpack.c.l.b16 %v222
    %v547 = vunpack.c.h.b16 %v222
    %v548 = vunpack.c.l.b16 %v223
    %v549 = vunpack.c.h.b16 %v223
    %v550 = vunpack.c.l.b16 %v224
    %v551 = vunpack.c.h.b16 %v224
    %v552 = vunpack.c.l.b16 %v225
    %v553 = vunpack.c.h.b16 %v225
    %v554 = vunpack.c.l.b16 %v226
    %v555 = vunpack.c.h.b16 %v226
    %v556 = vunpack.c.l.b16 %v227
    %v557 = vunpack.c.h.b16 %v227
    %v558 = vunpack.c.l.b16 %v228
    %v559 = vunpack.c.h.b16 %v228
    %v560 = vunpack.c.l.b16 %v229
    %v561 = vunpack.c.h.b16 %v229
    %v562 = vunpack.c.l.b16 %v230
    %v563 = vunpack.c.h.b16 %v230
    %v564 = vunpack.c.l.b16 %v231
    %v565 = vunpack.c.h.b16 %v231
    %v566 = vunpack.c.l.b16 %v232
    %v567 = vunpack.c.h.b16 %v232
    %v568 = vunpack.c.l.b16 %v233
    %v569 = vunpack.c.h.b16 %v233
    %v570 = vunpack.c.l.b16 %v234
    %v571 = vunpack.c.h.b16 %v234
    %v572 = vunpack.c.l.b16 %v235
    %v573 = vunpack.c.h.b16 %v235
    %v574 = vunpack.c.l.b16 %v236
    %v575 = vunpack.c.h.b16 %v236
    %v576 = vunpack.c.l.b16 %v237
    %v577 = vunpack.c.h.b16 %v237
    %v578 = vunpack.c.l.b16 %v238
    %v579 = vunpack.c.h.b16 %v238
    %v580 = vunpack.c.l.b16 %v239
    %v581 = vunpack.c.h.b16 %v239
    %v582 = vunpack.c.l.b16 %v240
    %v583 = vunpack.c.h.b16 %v240
    %v584 = vpack.c.b16 %v394, %v392
    %v585 = vpack.c.b16 %v395, %v393
    %v586 = vpack.c.b16 %v398, %v396
    %v587 = vpack.c.b16 %v399, %v397
    %v588 = vpack.c.b16 %v402, %v400
    %v589 = vpack.c.b16 %v403, %v401
    %v590 = vpack.c.b16 %v406, %v404
    %v591 = vpack.c.b16 %v407, %v405
    %v592 = vpack.c.b16 %v410, %v408
    %v593 = vpack.c.b16 %v411, %v409
    %v594 = vpack.c.b16 %v414, %v412
    %v595 = vpack.c.b16 %v415, %v413
    %v596 = vpack.c.b16 %v418, %v416
    %v597 = vpack.c.b16 %v419, %v417
    %v598 = vpack.c.b16 %v422, %v420
    %v599 = vpack.c.b16 %v423, %v421
    %v600 = vpack.c.b16 %v426, %v424
    %v601 = vpack.c.b16 %v427, %v425
    %v602 = vpack.c.b16 %v430, %v428
    %v603 = vpack.c.b16 %v431, %v429
    %v604 = vpack.c.b16 %v434, %v432
    %v605 = vpack.c.b16 %v435, %v433
    %v606 = vpack.c.b16 %v438, %v436
    %v607 = vpack.c.b16 %v439, %v437
    %v608 = vpack.c.b16 %v442, %v440
    %v609 = vpack.c.b16 %v443, %v441
    %v610 = vpack.c.b16 %v446, %v444
    %v611 = vpack.c.b16 %v447, %v445
    %v612 = vpack.c.b16 %v450, %v448
    %v613 = vpack.c.b16 %v451, %v449
    %v614 = vpack.c.b16 %v454, %v452
    %v615 = vpack.c.b16 %v455, %v453
    %v616 = vpack.c.b16 %v458, %v456
    %v617 = vpack.c.b16 %v459, %v457
    %v618 = vpack.c.b16 %v462, %v460
    %v619 = vpack.c.b16 %v463, %v461
    %v620 = vpack.c.b16 %v466, %v464
    %v621 = vpack.c.b16 %v467, %v465
    %v622 = vpack.c.b16 %v470, %v468
    %v623 = vpack.c.b16 %v471, %v469
    %v624 = vpack.c.b16 %v474, %v472
    %v625 = vpack.c.b16 %v475, %v473
    %v626 = vpack.c.b16 %v478, %v476
    %v627 = vpack.c.b16 %v479, %v477
    %v628 = vpack.c.b16 %v482, %v480
    %v629 = vpack.c.b16 %v483, %v481
    %v630 = vpack.c.b16 %v486, %v484
    %v631 = vpack.c.b16 %v487, %v485
    %v632 = vpack.c.b16 %v490, %v488
    %v633 = vpack.c.b16 %v491, %v489
    %v634 = vpack.c.b16 %v494, %v492
    %v635 = vpack.c.b16 %v495, %v493
    %v636 = vpack.c.b16 %v498, %v496
    %v637 = vpack.c.b16 %v499, %v497
    %v638 = vpack.c.b16 %v502, %v500
    %v639 = vpack.c.b16 %v503, %v501
    %v640 = vpack.c.b16 %v506, %v504
    %v641 = vpack.c.b16 %v507, %v505
    %v642 = vpack.c.b16 %v510, %v508
    %v643 = vpack.c.b16 %v511, %v509
    %v644 = vpack.c.b16 %v514, %v512
    %v645 = vpack.c.b16 %v515, %v513
    %v646 = vpack.c.b16 %v518, %v516
    %v647 = vpack.c.b16 %v519, %v517
    %v648 = vpack.c.b16 %v522, %v520
    %v649 = vpack.c.b16 %v523, %v521
    %v650 = vpack.c.b16 %v526, %v524
    %v651 = vpack.c.b16 %v527, %v525
    %v652 = vpack.c.b16 %v530, %v528
    %v653 = vpack.c.b16 %v531, %v529
    %v654 = vpack.c.b16 %v534, %v532
    %v655 = vpack.c.b16 %v535, %v533
    %v656 = vpack.c.b16 %v538, %v536
    %v657 = vpack.c.b16 %v539, %v537
    %v658 = vpack.c.b16 %v542, %v540
    %v659 = vpack.c.b16 %v543, %v541
    %v660 = vpack.c.b16 %v546, %v544
    %v661 = vpack.c.b16 %v547, %v545
    %v662 = vpack.c.b16 %v550, %v548
    %v663 = vpack.c.b16 %v551, %v549
    %v664 = vpack.c.b16 %v554, %v552
    %v665 = vpack.c.b16 %v555, %v553
    %v666 = vpack.c.b16 %v558, %v556
    %v667 = vpack.c.b16 %v559, %v557
    %v668 = vpack.c.b16 %v562, %v560
    %v669 = vpack.c.b16 %v563, %v561
    %v670 = vpack.c.b16 %v566, %v564
    %v671 = vpack.c.b16 %v567, %v565
    %v672 = vpack.c.b16 %v570, %v568
    %v673 = vpack.c.b16 %v571, %v569
    %v674 = vpack.c.b16 %v574, %v572
    %v675 = vpack.c.b16 %v575, %v573
    %v676 = vpack.c.b16 %v578, %v576
    %v677 = vpack.c.b16 %v579, %v577
    %v678 = vpack.c.b16 %v582, %v580
    %v679 = vpack.c.b16 %v583, %v581
    %776 = vmatprep.subr.bf16.mxu0 %v599
    %777 = vmatpush1.bf16.msra.mxu0 %v598
    %778 = vmatprep.subr.bf16.mxu0 %v597
    %779 = vmatpush1.bf16.msra.mxu0 %v596
    %780 = vmatprep.subr.bf16.mxu0 %v595
    %781 = vmatpush1.bf16.msra.mxu0 %v594
    %782 = vmatprep.subr.bf16.mxu0 %v593
    %783 = vmatpush1.bf16.msra.mxu0 %v592
    %784 = vmatprep.subr.bf16.mxu0 %v591
    %785 = vmatpush1.bf16.msra.mxu0 %v590
    %786 = vmatprep.subr.bf16.mxu0 %v589
    %787 = vmatpush1.bf16.msra.mxu0 %v588
    %788 = vmatprep.subr.bf16.mxu0 %v587
    %789 = vmatpush1.bf16.msra.mxu0 %v586
    %790 = vmatprep.subr.bf16.mxu0 %v585
    %791 = vmatpush1.bf16.msra.mxu0 %v584
    %792 = vmatprep.subr.bf16.mxu0 %v615
    %793 = vmatpush2.bf16.msra.mxu0 %v614
    %794 = vmatprep.subr.bf16.mxu0 %v613
    %795 = vmatpush2.bf16.msra.mxu0 %v612
    %796 = vmatprep.subr.bf16.mxu0 %v611
    %797 = vmatpush2.bf16.msra.mxu0 %v610
    %798 = vmatprep.subr.bf16.mxu0 %v609
    %799 = vmatpush2.bf16.msra.mxu0 %v608
    %800 = vmatprep.subr.bf16.mxu0 %v607
    %801 = vmatpush2.bf16.msra.mxu0 %v606
    %802 = vmatprep.subr.bf16.mxu0 %v605
    %803 = vmatpush2.bf16.msra.mxu0 %v604
    %804 = vmatprep.subr.bf16.mxu0 %v603
    %805 = vmatpush2.bf16.msra.mxu0 %v602
    %806 = vmatprep.subr.bf16.mxu0 %v601
    %807 = vmatpush2.bf16.msra.mxu0 %v600
    %808 = vmatprep.mubr.bf16.mxu0 %v285
    %809 = vmatmul.mubr.bf16.gmra.mxu0 %v284
    %v810 = vpop.f32.mrf.mxu0
    %v811 = vadd.f32 %v246, %v810
    %v812 = vpop.f32.mrf.mxu0
    %v813 = vadd.f32 %v250, %v812
    %v814 = vpop.f32.mrf.mxu0
    %v815 = vpop.f32.mrf.mxu0
    %816 = vdwg.mxu0
    %817 = vmatprep.subr.bf16.mxu0 %v631
    %818 = vmatpush1.bf16.msra.mxu0 %v630
    %819 = vmatprep.subr.bf16.mxu0 %v629
    %820 = vmatpush1.bf16.msra.mxu0 %v628
    %821 = vmatprep.subr.bf16.mxu0 %v627
    %822 = vmatpush1.bf16.msra.mxu0 %v626
    %823 = vmatprep.subr.bf16.mxu0 %v625
    %824 = vmatpush1.bf16.msra.mxu0 %v624
    %825 = vmatprep.subr.bf16.mxu0 %v623
    %826 = vmatpush1.bf16.msra.mxu0 %v622
    %827 = vmatprep.subr.bf16.mxu0 %v621
    %828 = vmatpush1.bf16.msra.mxu0 %v620
    %829 = vmatprep.subr.bf16.mxu0 %v619
    %830 = vmatpush1.bf16.msra.mxu0 %v618
    %831 = vmatprep.subr.bf16.mxu0 %v617
    %832 = vmatpush1.bf16.msra.mxu0 %v616
    %833 = vmatprep.subr.bf16.mxu0 %v647
    %834 = vmatpush2.bf16.msra.mxu0 %v646
    %835 = vmatprep.subr.bf16.mxu0 %v645
    %836 = vmatpush2.bf16.msra.mxu0 %v644
    %837 = vmatprep.subr.bf16.mxu0 %v643
    %838 = vmatpush2.bf16.msra.mxu0 %v642
    %839 = vmatprep.subr.bf16.mxu0 %v641
    %840 = vmatpush2.bf16.msra.mxu0 %v640
    %841 = vmatprep.subr.bf16.mxu0 %v639
    %842 = vmatpush2.bf16.msra.mxu0 %v638
    %843 = vmatprep.subr.bf16.mxu0 %v637
    %844 = vmatpush2.bf16.msra.mxu0 %v636
    %845 = vmatprep.subr.bf16.mxu0 %v635
    %846 = vmatpush2.bf16.msra.mxu0 %v634
    %847 = vmatprep.subr.bf16.mxu0 %v633
    %848 = vmatpush2.bf16.msra.mxu0 %v632
    %849 = vmatprep.mubr.bf16.mxu0 %v287
    %850 = vmatmul.mubr.bf16.gmra.mxu0 %v286
    %v851 = vpop.f32.mrf.mxu0
    %v852 = vadd.f32 %v811, %v851
    %v853 = vpop.f32.mrf.mxu0
    %v854 = vadd.f32 %v813, %v853
    %v855 = vpop.f32.mrf.mxu0
    %v856 = vpop.f32.mrf.mxu0
    %857 = vdwg.mxu0
    %858 = vmatprep.subr.bf16.mxu0 %v663
    %859 = vmatpush1.bf16.msra.mxu0 %v662
    %860 = vmatprep.subr.bf16.mxu0 %v661
    %861 = vmatpush1.bf16.msra.mxu0 %v660
    %862 = vmatprep.subr.bf16.mxu0 %v659
    %863 = vmatpush1.bf16.msra.mxu0 %v658
    %864 = vmatprep.subr.bf16.mxu0 %v657
    %865 = vmatpush1.bf16.msra.mxu0 %v656
    %866 = vmatprep.subr.bf16.mxu0 %v655
    %867 = vmatpush1.bf16.msra.mxu0 %v654
    %868 = vmatprep.subr.bf16.mxu0 %v653
    %869 = vmatpush1.bf16.msra.mxu0 %v652
    %870 = vmatprep.subr.bf16.mxu0 %v651
    %871 = vmatpush1.bf16.msra.mxu0 %v650
    %872 = vmatprep.subr.bf16.mxu0 %v649
    %873 = vmatpush1.bf16.msra.mxu0 %v648
    %874 = vmatprep.subr.bf16.mxu0 %v679
    %875 = vmatpush2.bf16.msra.mxu0 %v678
    %876 = vmatprep.subr.bf16.mxu0 %v677
    %877 = vmatpush2.bf16.msra.mxu0 %v676
    %878 = vmatprep.subr.bf16.mxu0 %v675
    %879 = vmatpush2.bf16.msra.mxu0 %v674
    %880 = vmatprep.subr.bf16.mxu0 %v673
    %881 = vmatpush2.bf16.msra.mxu0 %v672
    %882 = vmatprep.subr.bf16.mxu0 %v671
    %883 = vmatpush2.bf16.msra.mxu0 %v670
    %884 = vmatprep.subr.bf16.mxu0 %v669
    %885 = vmatpush2.bf16.msra.mxu0 %v668
    %886 = vmatprep.subr.bf16.mxu0 %v667
    %887 = vmatpush2.bf16.msra.mxu0 %v666
    %888 = vmatprep.subr.bf16.mxu0 %v665
    %889 = vmatpush2.bf16.msra.mxu0 %v664
    %890 = vmatprep.mubr.bf16.mxu0 %v289
    %891 = vmatmul.mubr.bf16.gmra.mxu0 %v288
    %v892 = vpop.f32.mrf.mxu0
    %v893 = vadd.f32 %v852, %v892
    %v894 = vpop.f32.mrf.mxu0
    %v895 = vadd.f32 %v854, %v894
    %v896 = vpop.f32.mrf.mxu0
    %v897 = vpop.f32.mrf.mxu0
    %898 = vdwg.mxu0
    %v899 = vmax.f32 %v893, 0.0
    %v900 = vmax.f32 %v895, 0.0
    %v901 = vpack.c.bf16 %v899, %v899
    %v902 = vpack.c.bf16 %v900, %v900
    %v903 = vld [vmem:[%s3] sm:$0xff]
    %v904 = vld [vmem:[%s3 + $0x8] sm:$0xff]
    %v905 = vld [vmem:[%s3 + $0x10] sm:$0xff]
    %v906 = vld [vmem:[%s3 + $0x18] sm:$0xff]
    %v907 = vld [vmem:[%s3 + $0x20] sm:$0xff]
    %v908 = vld [vmem:[%s3 + $0x28] sm:$0xff]
    %v909 = vld [vmem:[%s3 + $0x30] sm:$0xff]
    %v910 = vld [vmem:[%s3 + $0x38] sm:$0xff]
    %v911 = vld [vmem:[%s3 + $0x40] sm:$0xff]
    %v912 = vld [vmem:[%s3 + $0x48] sm:$0xff]
    %v913 = vld [vmem:[%s3 + $0x50] sm:$0xff]
    %v914 = vld [vmem:[%s3 + $0x58] sm:$0xff]
    %v915 = vld [vmem:[%s3 + $0x60] sm:$0xff]
    %v916 = vld [vmem:[%s3 + $0x68] sm:$0xff]
    %v917 = vld [vmem:[%s3 + $0x70] sm:$0xff]
    %v918 = vld [vmem:[%s3 + $0x78] sm:$0xff]
    %v919 = vld [vmem:[%s3 + $0x80] sm:$0xff]
    %v920 = vld [vmem:[%s3 + $0x88] sm:$0xff]
    %v921 = vld [vmem:[%s3 + $0x90] sm:$0xff]
    %v922 = vld [vmem:[%s3 + $0x98] sm:$0xff]
    %v923 = vld [vmem:[%s3 + $0xa0] sm:$0xff]
    %v924 = vld [vmem:[%s3 + $0xa8] sm:$0xff]
    %v925 = vld [vmem:[%s3 + $0xb0] sm:$0xff]
    %v926 = vld [vmem:[%s3 + $0xb8] sm:$0xff]
    %v927 = vld [vmem:[%s3 + $0xc0] sm:$0xff]
    %v928 = vld [vmem:[%s3 + $0xc8] sm:$0xff]
    %v929 = vld [vmem:[%s3 + $0xd0] sm:$0xff]
    %v930 = vld [vmem:[%s3 + $0xd8] sm:$0xff]
    %v931 = vld [vmem:[%s3 + $0xe0] sm:$0xff]
    %v932 = vld [vmem:[%s3 + $0xe8] sm:$0xff]
    %v933 = vld [vmem:[%s3 + $0xf0] sm:$0xff]
    %v934 = vld [vmem:[%s3 + $0xf8] sm:$0xff]
    %v935 = vld [vmem:[%s3 + $0x100] sm:$0xff]
    %v936 = vld [vmem:[%s3 + $0x108] sm:$0xff]
    %v937 = vld [vmem:[%s3 + $0x110] sm:$0xff]
    %v938 = vld [vmem:[%s3 + $0x118] sm:$0xff]
    %v939 = vld [vmem:[%s3 + $0x120] sm:$0xff]
    %v940 = vld [vmem:[%s3 + $0x128] sm:$0xff]
    %v941 = vld [vmem:[%s3 + $0x130] sm:$0xff]
    %v942 = vld [vmem:[%s3 + $0x138] sm:$0xff]
    %v943 = vld [vmem:[%s3 + $0x140] sm:$0xff]
    %v944 = vld [vmem:[%s3 + $0x148] sm:$0xff]
    %v945 = vld [vmem:[%s3 + $0x150] sm:$0xff]
    %v946 = vld [vmem:[%s3 + $0x158] sm:$0xff]
    %v947 = vld [vmem:[%s3 + $0x160] sm:$0xff]
    %v948 = vld [vmem:[%s3 + $0x168] sm:$0xff]
    %v949 = vld [vmem:[%s3 + $0x170] sm:$0xff]
    %v950 = vld [vmem:[%s3 + $0x178] sm:$0xff]
    %v951 = vld [vmem:[%s3 + $0x180] sm:$0xff]
    %v952 = vld [vmem:[%s3 + $0x188] sm:$0xff]
    %v953 = vld [vmem:[%s3 + $0x190] sm:$0xff]
    %v954 = vld [vmem:[%s3 + $0x198] sm:$0xff]
    %v955 = vld [vmem:[%s3 + $0x1a0] sm:$0xff]
    %v956 = vld [vmem:[%s3 + $0x1a8] sm:$0xff]
    %v957 = vld [vmem:[%s3 + $0x1b0] sm:$0xff]
    %v958 = vld [vmem:[%s3 + $0x1b8] sm:$0xff]
    %v959 = vld [vmem:[%s3 + $0x1c0] sm:$0xff]
    %v960 = vld [vmem:[%s3 + $0x1c8] sm:$0xff]
    %v961 = vld [vmem:[%s3 + $0x1d0] sm:$0xff]
    %v962 = vld [vmem:[%s3 + $0x1d8] sm:$0xff]
    %v963 = vld [vmem:[%s3 + $0x1e0] sm:$0xff]
    %v964 = vld [vmem:[%s3 + $0x1e8] sm:$0xff]
    %v965 = vld [vmem:[%s3 + $0x1f0] sm:$0xff]
    %v966 = vld [vmem:[%s3 + $0x1f8] sm:$0xff]
    %v967 = vld [vmem:[%s3 + $0x200] sm:$0xff]
    %v968 = vld [vmem:[%s3 + $0x208] sm:$0xff]
    %v969 = vld [vmem:[%s3 + $0x210] sm:$0xff]
    %v970 = vld [vmem:[%s3 + $0x218] sm:$0xff]
    %v971 = vld [vmem:[%s3 + $0x220] sm:$0xff]
    %v972 = vld [vmem:[%s3 + $0x228] sm:$0xff]
    %v973 = vld [vmem:[%s3 + $0x230] sm:$0xff]
    %v974 = vld [vmem:[%s3 + $0x238] sm:$0xff]
    %v975 = vld [vmem:[%s3 + $0x240] sm:$0xff]
    %v976 = vld [vmem:[%s3 + $0x248] sm:$0xff]
    %v977 = vld [vmem:[%s3 + $0x250] sm:$0xff]
    %v978 = vld [vmem:[%s3 + $0x258] sm:$0xff]
    %v979 = vld [vmem:[%s3 + $0x260] sm:$0xff]
    %v980 = vld [vmem:[%s3 + $0x268] sm:$0xff]
    %v981 = vld [vmem:[%s3 + $0x270] sm:$0xff]
    %v982 = vld [vmem:[%s3 + $0x278] sm:$0xff]
    %v983 = vld [vmem:[%s3 + $0x280] sm:$0xff]
    %v984 = vld [vmem:[%s3 + $0x288] sm:$0xff]
    %v985 = vld [vmem:[%s3 + $0x290] sm:$0xff]
    %v986 = vld [vmem:[%s3 + $0x298] sm:$0xff]
    %v987 = vld [vmem:[%s3 + $0x2a0] sm:$0xff]
    %v988 = vld [vmem:[%s3 + $0x2a8] sm:$0xff]
    %v989 = vld [vmem:[%s3 + $0x2b0] sm:$0xff]
    %v990 = vld [vmem:[%s3 + $0x2b8] sm:$0xff]
    %v991 = vld [vmem:[%s3 + $0x2c0] sm:$0xff]
    %v992 = vld [vmem:[%s3 + $0x2c8] sm:$0xff]
    %v993 = vld [vmem:[%s3 + $0x2d0] sm:$0xff]
    %v994 = vld [vmem:[%s3 + $0x2d8] sm:$0xff]
    %v995 = vld [vmem:[%s3 + $0x2e0] sm:$0xff]
    %v996 = vld [vmem:[%s3 + $0x2e8] sm:$0xff]
    %v997 = vld [vmem:[%s3 + $0x2f0] sm:$0xff]
    %v998 = vld [vmem:[%s3 + $0x2f8] sm:$0xff]
    %v999 = vld [vmem:[%s4] sm:$0x3f]
    %v1001 = vlaneseq
    %v1002 = vshrl.u32 %v1001, 7
    %v1003 = vsub.s32 0, %v1002
    %v1004 = vrot.slane %v999, %v1003
    %v1005 = vlaneseq
    %v1006 = vshrl.u32 %v1005, 7
    %v1007 = vsub.s32 1, %v1006
    %v1008 = vrot.slane %v999, %v1007
    %v1009 = vlaneseq
    %v1010 = vshrl.u32 %v1009, 7
    %v1011 = vsub.s32 2, %v1010
    %v1012 = vrot.slane %v999, %v1011
    %v1013 = vlaneseq
    %v1014 = vshrl.u32 %v1013, 7
    %v1015 = vsub.s32 3, %v1014
    %v1016 = vrot.slane %v999, %v1015
    %v1017 = vlaneseq
    %v1018 = vshrl.u32 %v1017, 7
    %v1019 = vsub.s32 4, %v1018
    %v1020 = vrot.slane %v999, %v1019
    %v1021 = vlaneseq
    %v1022 = vshrl.u32 %v1021, 7
    %v1023 = vsub.s32 5, %v1022
    %v1024 = vrot.slane %v999, %v1023
    %v1127 = vunpack.c.l.b16 %v903
    %v1128 = vunpack.c.h.b16 %v903
    %v1129 = vunpack.c.l.b16 %v904
    %v1130 = vunpack.c.h.b16 %v904
    %v1131 = vunpack.c.l.b16 %v905
    %v1132 = vunpack.c.h.b16 %v905
    %v1133 = vunpack.c.l.b16 %v906
    %v1134 = vunpack.c.h.b16 %v906
    %v1135 = vunpack.c.l.b16 %v907
    %v1136 = vunpack.c.h.b16 %v907
    %v1137 = vunpack.c.l.b16 %v908
    %v1138 = vunpack.c.h.b16 %v908
    %v1139 = vunpack.c.l.b16 %v909
    %v1140 = vunpack.c.h.b16 %v909
    %v1141 = vunpack.c.l.b16 %v910
    %v1142 = vunpack.c.h.b16 %v910
    %v1143 = vunpack.c.l.b16 %v911
    %v1144 = vunpack.c.h.b16 %v911
    %v1145 = vunpack.c.l.b16 %v912
    %v1146 = vunpack.c.h.b16 %v912
    %v1147 = vunpack.c.l.b16 %v913
    %v1148 = vunpack.c.h.b16 %v913
    %v1149 = vunpack.c.l.b16 %v914
    %v1150 = vunpack.c.h.b16 %v914
    %v1151 = vunpack.c.l.b16 %v915
    %v1152 = vunpack.c.h.b16 %v915
    %v1153 = vunpack.c.l.b16 %v916
    %v1154 = vunpack.c.h.b16 %v916
    %v1155 = vunpack.c.l.b16 %v917
    %v1156 = vunpack.c.h.b16 %v917
    %v1157 = vunpack.c.l.b16 %v918
    %v1158 = vunpack.c.h.b16 %v918
    %v1159 = vunpack.c.l.b16 %v919
    %v1160 = vunpack.c.h.b16 %v919
    %v1161 = vunpack.c.l.b16 %v920
    %v1162 = vunpack.c.h.b16 %v920
    %v1163 = vunpack.c.l.b16 %v921
    %v1164 = vunpack.c.h.b16 %v921
    %v1165 = vunpack.c.l.b16 %v922
    %v1166 = vunpack.c.h.b16 %v922
    %v1167 = vunpack.c.l.b16 %v923
    %v1168 = vunpack.c.h.b16 %v923
    %v1169 = vunpack.c.l.b16 %v924
    %v1170 = vunpack.c.h.b16 %v924
    %v1171 = vunpack.c.l.b16 %v925
    %v1172 = vunpack.c.h.b16 %v925
    %v1173 = vunpack.c.l.b16 %v926
    %v1174 = vunpack.c.h.b16 %v926
    %v1175 = vunpack.c.l.b16 %v927
    %v1176 = vunpack.c.h.b16 %v927
    %v1177 = vunpack.c.l.b16 %v928
    %v1178 = vunpack.c.h.b16 %v928
    %v1179 = vunpack.c.l.b16 %v929
    %v1180 = vunpack.c.h.b16 %v929
    %v1181 = vunpack.c.l.b16 %v930
    %v1182 = vunpack.c.h.b16 %v930
    %v1183 = vunpack.c.l.b16 %v931
    %v1184 = vunpack.c.h.b16 %v931
    %v1185 = vunpack.c.l.b16 %v932
    %v1186 = vunpack.c.h.b16 %v932
    %v1187 = vunpack.c.l.b16 %v933
    %v1188 = vunpack.c.h.b16 %v933
    %v1189 = vunpack.c.l.b16 %v934
    %v1190 = vunpack.c.h.b16 %v934
    %v1191 = vunpack.c.l.b16 %v935
    %v1192 = vunpack.c.h.b16 %v935
    %v1193 = vunpack.c.l.b16 %v936
    %v1194 = vunpack.c.h.b16 %v936
    %v1195 = vunpack.c.l.b16 %v937
    %v1196 = vunpack.c.h.b16 %v937
    %v1197 = vunpack.c.l.b16 %v938
    %v1198 = vunpack.c.h.b16 %v938
    %v1199 = vunpack.c.l.b16 %v939
    %v1200 = vunpack.c.h.b16 %v939
    %v1201 = vunpack.c.l.b16 %v940
    %v1202 = vunpack.c.h.b16 %v940
    %v1203 = vunpack.c.l.b16 %v941
    %v1204 = vunpack.c.h.b16 %v941
    %v1205 = vunpack.c.l.b16 %v942
    %v1206 = vunpack.c.h.b16 %v942
    %v1207 = vunpack.c.l.b16 %v943
    %v1208 = vunpack.c.h.b16 %v943
    %v1209 = vunpack.c.l.b16 %v944
    %v1210 = vunpack.c.h.b16 %v944
    %v1211 = vunpack.c.l.b16 %v945
    %v1212 = vunpack.c.h.b16 %v945
    %v1213 = vunpack.c.l.b16 %v946
    %v1214 = vunpack.c.h.b16 %v946
    %v1215 = vunpack.c.l.b16 %v947
    %v1216 = vunpack.c.h.b16 %v947
    %v1217 = vunpack.c.l.b16 %v948
    %v1218 = vunpack.c.h.b16 %v948
    %v1219 = vunpack.c.l.b16 %v949
    %v1220 = vunpack.c.h.b16 %v949
    %v1221 = vunpack.c.l.b16 %v950
    %v1222 = vunpack.c.h.b16 %v950
    %v1223 = vunpack.c.l.b16 %v951
    %v1224 = vunpack.c.h.b16 %v951
    %v1225 = vunpack.c.l.b16 %v952
    %v1226 = vunpack.c.h.b16 %v952
    %v1227 = vunpack.c.l.b16 %v953
    %v1228 = vunpack.c.h.b16 %v953
    %v1229 = vunpack.c.l.b16 %v954
    %v1230 = vunpack.c.h.b16 %v954
    %v1231 = vunpack.c.l.b16 %v955
    %v1232 = vunpack.c.h.b16 %v955
    %v1233 = vunpack.c.l.b16 %v956
    %v1234 = vunpack.c.h.b16 %v956
    %v1235 = vunpack.c.l.b16 %v957
    %v1236 = vunpack.c.h.b16 %v957
    %v1237 = vunpack.c.l.b16 %v958
    %v1238 = vunpack.c.h.b16 %v958
    %v1239 = vunpack.c.l.b16 %v959
    %v1240 = vunpack.c.h.b16 %v959
    %v1241 = vunpack.c.l.b16 %v960
    %v1242 = vunpack.c.h.b16 %v960
    %v1243 = vunpack.c.l.b16 %v961
    %v1244 = vunpack.c.h.b16 %v961
    %v1245 = vunpack.c.l.b16 %v962
    %v1246 = vunpack.c.h.b16 %v962
    %v1247 = vunpack.c.l.b16 %v963
    %v1248 = vunpack.c.h.b16 %v963
    %v1249 = vunpack.c.l.b16 %v964
    %v1250 = vunpack.c.h.b16 %v964
    %v1251 = vunpack.c.l.b16 %v965
    %v1252 = vunpack.c.h.b16 %v965
    %v1253 = vunpack.c.l.b16 %v966
    %v1254 = vunpack.c.h.b16 %v966
    %v1255 = vunpack.c.l.b16 %v967
    %v1256 = vunpack.c.h.b16 %v967
    %v1257 = vunpack.c.l.b16 %v968
    %v1258 = vunpack.c.h.b16 %v968
    %v1259 = vunpack.c.l.b16 %v969
    %v1260 = vunpack.c.h.b16 %v969
    %v1261 = vunpack.c.l.b16 %v970
    %v1262 = vunpack.c.h.b16 %v970
    %v1263 = vunpack.c.l.b16 %v971
    %v1264 = vunpack.c.h.b16 %v971
    %v1265 = vunpack.c.l.b16 %v972
    %v1266 = vunpack.c.h.b16 %v972
    %v1267 = vunpack.c.l.b16 %v973
    %v1268 = vunpack.c.h.b16 %v973
    %v1269 = vunpack.c.l.b16 %v974
    %v1270 = vunpack.c.h.b16 %v974
    %v1271 = vunpack.c.l.b16 %v975
    %v1272 = vunpack.c.h.b16 %v975
    %v1273 = vunpack.c.l.b16 %v976
    %v1274 = vunpack.c.h.b16 %v976
    %v1275 = vunpack.c.l.b16 %v977
    %v1276 = vunpack.c.h.b16 %v977
    %v1277 = vunpack.c.l.b16 %v978
    %v1278 = vunpack.c.h.b16 %v978
    %v1279 = vunpack.c.l.b16 %v979
    %v1280 = vunpack.c.h.b16 %v979
    %v1281 = vunpack.c.l.b16 %v980
    %v1282 = vunpack.c.h.b16 %v980
    %v1283 = vunpack.c.l.b16 %v981
    %v1284 = vunpack.c.h.b16 %v981
    %v1285 = vunpack.c.l.b16 %v982
    %v1286 = vunpack.c.h.b16 %v982
    %v1287 = vunpack.c.l.b16 %v983
    %v1288 = vunpack.c.h.b16 %v983
    %v1289 = vunpack.c.l.b16 %v984
    %v1290 = vunpack.c.h.b16 %v984
    %v1291 = vunpack.c.l.b16 %v985
    %v1292 = vunpack.c.h.b16 %v985
    %v1293 = vunpack.c.l.b16 %v986
    %v1294 = vunpack.c.h.b16 %v986
    %v1295 = vunpack.c.l.b16 %v987
    %v1296 = vunpack.c.h.b16 %v987
    %v1297 = vunpack.c.l.b16 %v988
    %v1298 = vunpack.c.h.b16 %v988
    %v1299 = vunpack.c.l.b16 %v989
    %v1300 = vunpack.c.h.b16 %v989
    %v1301 = vunpack.c.l.b16 %v990
    %v1302 = vunpack.c.h.b16 %v990
    %v1303 = vunpack.c.l.b16 %v991
    %v1304 = vunpack.c.h.b16 %v991
    %v1305 = vunpack.c.l.b16 %v992
    %v1306 = vunpack.c.h.b16 %v992
    %v1307 = vunpack.c.l.b16 %v993
    %v1308 = vunpack.c.h.b16 %v993
    %v1309 = vunpack.c.l.b16 %v994
    %v1310 = vunpack.c.h.b16 %v994
    %v1311 = vunpack.c.l.b16 %v995
    %v1312 = vunpack.c.h.b16 %v995
    %v1313 = vunpack.c.l.b16 %v996
    %v1314 = vunpack.c.h.b16 %v996
    %v1315 = vunpack.c.l.b16 %v997
    %v1316 = vunpack.c.h.b16 %v997
    %v1317 = vunpack.c.l.b16 %v998
    %v1318 = vunpack.c.h.b16 %v998
    %v1319 = vpack.c.b16 %v1133, %v1127
    %v1320 = vpack.c.b16 %v1134, %v1128
    %v1321 = vpack.c.b16 %v1135, %v1129
    %v1322 = vpack.c.b16 %v1136, %v1130
    %v1323 = vpack.c.b16 %v1137, %v1131
    %v1324 = vpack.c.b16 %v1138, %v1132
    %v1325 = vpack.c.b16 %v1145, %v1139
    %v1326 = vpack.c.b16 %v1146, %v1140
    %v1327 = vpack.c.b16 %v1147, %v1141
    %v1328 = vpack.c.b16 %v1148, %v1142
    %v1329 = vpack.c.b16 %v1149, %v1143
    %v1330 = vpack.c.b16 %v1150, %v1144
    %v1331 = vpack.c.b16 %v1157, %v1151
    %v1332 = vpack.c.b16 %v1158, %v1152
    %v1333 = vpack.c.b16 %v1159, %v1153
    %v1334 = vpack.c.b16 %v1160, %v1154
    %v1335 = vpack.c.b16 %v1161, %v1155
    %v1336 = vpack.c.b16 %v1162, %v1156
    %v1337 = vpack.c.b16 %v1169, %v1163
    %v1338 = vpack.c.b16 %v1170, %v1164
    %v1339 = vpack.c.b16 %v1171, %v1165
    %v1340 = vpack.c.b16 %v1172, %v1166
    %v1341 = vpack.c.b16 %v1173, %v1167
    %v1342 = vpack.c.b16 %v1174, %v1168
    %v1343 = vpack.c.b16 %v1181, %v1175
    %v1344 = vpack.c.b16 %v1182, %v1176
    %v1345 = vpack.c.b16 %v1183, %v1177
    %v1346 = vpack.c.b16 %v1184, %v1178
    %v1347 = vpack.c.b16 %v1185, %v1179
    %v1348 = vpack.c.b16 %v1186, %v1180
    %v1349 = vpack.c.b16 %v1193, %v1187
    %v1350 = vpack.c.b16 %v1194, %v1188
    %v1351 = vpack.c.b16 %v1195, %v1189
    %v1352 = vpack.c.b16 %v1196, %v1190
    %v1353 = vpack.c.b16 %v1197, %v1191
    %v1354 = vpack.c.b16 %v1198, %v1192
    %v1355 = vpack.c.b16 %v1205, %v1199
    %v1356 = vpack.c.b16 %v1206, %v1200
    %v1357 = vpack.c.b16 %v1207, %v1201
    %v1358 = vpack.c.b16 %v1208, %v1202
    %v1359 = vpack.c.b16 %v1209, %v1203
    %v1360 = vpack.c.b16 %v1210, %v1204
    %v1361 = vpack.c.b16 %v1217, %v1211
    %v1362 = vpack.c.b16 %v1218, %v1212
    %v1363 = vpack.c.b16 %v1219, %v1213
    %v1364 = vpack.c.b16 %v1220, %v1214
    %v1365 = vpack.c.b16 %v1221, %v1215
    %v1366 = vpack.c.b16 %v1222, %v1216
    %v1367 = vpack.c.b16 %v1229, %v1223
    %v1368 = vpack.c.b16 %v1230, %v1224
    %v1369 = vpack.c.b16 %v1231, %v1225
    %v1370 = vpack.c.b16 %v1232, %v1226
    %v1371 = vpack.c.b16 %v1233, %v1227
    %v1372 = vpack.c.b16 %v1234, %v1228
    %v1373 = vpack.c.b16 %v1241, %v1235
    %v1374 = vpack.c.b16 %v1242, %v1236
    %v1375 = vpack.c.b16 %v1243, %v1237
    %v1376 = vpack.c.b16 %v1244, %v1238
    %v1377 = vpack.c.b16 %v1245, %v1239
    %v1378 = vpack.c.b16 %v1246, %v1240
    %v1379 = vpack.c.b16 %v1253, %v1247
    %v1380 = vpack.c.b16 %v1254, %v1248
    %v1381 = vpack.c.b16 %v1255, %v1249
    %v1382 = vpack.c.b16 %v1256, %v1250
    %v1383 = vpack.c.b16 %v1257, %v1251
    %v1384 = vpack.c.b16 %v1258, %v1252
    %v1385 = vpack.c.b16 %v1265, %v1259
    %v1386 = vpack.c.b16 %v1266, %v1260
    %v1387 = vpack.c.b16 %v1267, %v1261
    %v1388 = vpack.c.b16 %v1268, %v1262
    %v1389 = vpack.c.b16 %v1269, %v1263
    %v1390 = vpack.c.b16 %v1270, %v1264
    %v1391 = vpack.c.b16 %v1277, %v1271
    %v1392 = vpack.c.b16 %v1278, %v1272
    %v1393 = vpack.c.b16 %v1279, %v1273
    %v1394 = vpack.c.b16 %v1280, %v1274
    %v1395 = vpack.c.b16 %v1281, %v1275
    %v1396 = vpack.c.b16 %v1282, %v1276
    %v1397 = vpack.c.b16 %v1289, %v1283
    %v1398 = vpack.c.b16 %v1290, %v1284
    %v1399 = vpack.c.b16 %v1291, %v1285
    %v1400 = vpack.c.b16 %v1292, %v1286
    %v1401 = vpack.c.b16 %v1293, %v1287
    %v1402 = vpack.c.b16 %v1294, %v1288
    %v1403 = vpack.c.b16 %v1301, %v1295
    %v1404 = vpack.c.b16 %v1302, %v1296
    %v1405 = vpack.c.b16 %v1303, %v1297
    %v1406 = vpack.c.b16 %v1304, %v1298
    %v1407 = vpack.c.b16 %v1305, %v1299
    %v1408 = vpack.c.b16 %v1306, %v1300
    %v1409 = vpack.c.b16 %v1313, %v1307
    %v1410 = vpack.c.b16 %v1314, %v1308
    %v1411 = vpack.c.b16 %v1315, %v1309
    %v1412 = vpack.c.b16 %v1316, %v1310
    %v1413 = vpack.c.b16 %v1317, %v1311
    %v1414 = vpack.c.b16 %v1318, %v1312
    %1511 = vmatprep.subr.bf16.mxu0 %v1362
    %1512 = vmatpush1.bf16.msra.mxu0 %v1361
    %1513 = vmatprep.subr.bf16.mxu0 %v1356
    %1514 = vmatpush1.bf16.msra.mxu0 %v1355
    %1515 = vmatprep.subr.bf16.mxu0 %v1350
    %1516 = vmatpush1.bf16.msra.mxu0 %v1349
    %1517 = vmatprep.subr.bf16.mxu0 %v1344
    %1518 = vmatpush1.bf16.msra.mxu0 %v1343
    %1519 = vmatprep.subr.bf16.mxu0 %v1338
    %1520 = vmatpush1.bf16.msra.mxu0 %v1337
    %1521 = vmatprep.subr.bf16.mxu0 %v1332
    %1522 = vmatpush1.bf16.msra.mxu0 %v1331
    %1523 = vmatprep.subr.bf16.mxu0 %v1326
    %1524 = vmatpush1.bf16.msra.mxu0 %v1325
    %1525 = vmatprep.subr.bf16.mxu0 %v1320
    %1526 = vmatpush1.bf16.msra.mxu0 %v1319
    %1527 = vmatprep.subr.bf16.mxu0 %v1410
    %1528 = vmatpush2.bf16.msra.mxu0 %v1409
    %1529 = vmatprep.subr.bf16.mxu0 %v1404
    %1530 = vmatpush2.bf16.msra.mxu0 %v1403
    %1531 = vmatprep.subr.bf16.mxu0 %v1398
    %1532 = vmatpush2.bf16.msra.mxu0 %v1397
    %1533 = vmatprep.subr.bf16.mxu0 %v1392
    %1534 = vmatpush2.bf16.msra.mxu0 %v1391
    %1535 = vmatprep.subr.bf16.mxu0 %v1386
    %1536 = vmatpush2.bf16.msra.mxu0 %v1385
    %1537 = vmatprep.subr.bf16.mxu0 %v1380
    %1538 = vmatpush2.bf16.msra.mxu0 %v1379
    %1539 = vmatprep.subr.bf16.mxu0 %v1374
    %1540 = vmatpush2.bf16.msra.mxu0 %v1373
    %1541 = vmatprep.subr.bf16.mxu0 %v1368
    %1542 = vmatpush2.bf16.msra.mxu0 %v1367
    %1543 = vmatprep.mubr.bf16.mxu0 %v902
    %1544 = vmatmul.mubr.bf16.gmra.mxu0 %v901
    %v1545 = vpop.f32.mrf.mxu0
    %v1546 = vadd.f32 %v1004, %v1545
    %v1547 = vpop.f32.mrf.mxu0
    %v1548 = vadd.f32 %v1008, %v1547
    %v1549 = vpop.f32.mrf.mxu0
    %v1550 = vpop.f32.mrf.mxu0
    %1551 = vdwg.mxu0
    %1552 = vmatprep.subr.bf16.mxu0 %v1364
    %1553 = vmatpush1.bf16.msra.mxu0 %v1363
    %1554 = vmatprep.subr.bf16.mxu0 %v1358
    %1555 = vmatpush1.bf16.msra.mxu0 %v1357
    %1556 = vmatprep.subr.bf16.mxu0 %v1352
    %1557 = vmatpush1.bf16.msra.mxu0 %v1351
    %1558 = vmatprep.subr.bf16.mxu0 %v1346
    %1559 = vmatpush1.bf16.msra.mxu0 %v1345
    %1560 = vmatprep.subr.bf16.mxu0 %v1340
    %1561 = vmatpush1.bf16.msra.mxu0 %v1339
    %1562 = vmatprep.subr.bf16.mxu0 %v1334
    %1563 = vmatpush1.bf16.msra.mxu0 %v1333
    %1564 = vmatprep.subr.bf16.mxu0 %v1328
    %1565 = vmatpush1.bf16.msra.mxu0 %v1327
    %1566 = vmatprep.subr.bf16.mxu0 %v1322
    %1567 = vmatpush1.bf16.msra.mxu0 %v1321
    %1568 = vmatprep.subr.bf16.mxu0 %v1412
    %1569 = vmatpush2.bf16.msra.mxu0 %v1411
    %1570 = vmatprep.subr.bf16.mxu0 %v1406
    %1571 = vmatpush2.bf16.msra.mxu0 %v1405
    %1572 = vmatprep.subr.bf16.mxu0 %v1400
    %1573 = vmatpush2.bf16.msra.mxu0 %v1399
    %1574 = vmatprep.subr.bf16.mxu0 %v1394
    %1575 = vmatpush2.bf16.msra.mxu0 %v1393
    %1576 = vmatprep.subr.bf16.mxu0 %v1388
    %1577 = vmatpush2.bf16.msra.mxu0 %v1387
    %1578 = vmatprep.subr.bf16.mxu0 %v1382
    %1579 = vmatpush2.bf16.msra.mxu0 %v1381
    %1580 = vmatprep.subr.bf16.mxu0 %v1376
    %1581 = vmatpush2.bf16.msra.mxu0 %v1375
    %1582 = vmatprep.subr.bf16.mxu0 %v1370
    %1583 = vmatpush2.bf16.msra.mxu0 %v1369
    %1584 = vmatprep.mubr.bf16.mxu0 %v902
    %1585 = vmatmul.mubr.bf16.gmra.mxu0 %v901
    %v1586 = vpop.f32.mrf.mxu0
    %v1587 = vadd.f32 %v1012, %v1586
    %v1588 = vpop.f32.mrf.mxu0
    %v1589 = vadd.f32 %v1016, %v1588
    %v1590 = vpop.f32.mrf.mxu0
    %v1591 = vpop.f32.mrf.mxu0
    %1592 = vdwg.mxu0
    %1593 = vmatprep.subr.bf16.mxu0 %v1366
    %1594 = vmatpush1.bf16.msra.mxu0 %v1365
    %1595 = vmatprep.subr.bf16.mxu0 %v1360
    %1596 = vmatpush1.bf16.msra.mxu0 %v1359
    %1597 = vmatprep.subr.bf16.mxu0 %v1354
    %1598 = vmatpush1.bf16.msra.mxu0 %v1353
    %1599 = vmatprep.subr.bf16.mxu0 %v1348
    %1600 = vmatpush1.bf16.msra.mxu0 %v1347
    %1601 = vmatprep.subr.bf16.mxu0 %v1342
    %1602 = vmatpush1.bf16.msra.mxu0 %v1341
    %1603 = vmatprep.subr.bf16.mxu0 %v1336
    %1604 = vmatpush1.bf16.msra.mxu0 %v1335
    %1605 = vmatprep.subr.bf16.mxu0 %v1330
    %1606 = vmatpush1.bf16.msra.mxu0 %v1329
    %1607 = vmatprep.subr.bf16.mxu0 %v1324
    %1608 = vmatpush1.bf16.msra.mxu0 %v1323
    %1609 = vmatprep.subr.bf16.mxu0 %v1414
    %1610 = vmatpush2.bf16.msra.mxu0 %v1413
    %1611 = vmatprep.subr.bf16.mxu0 %v1408
    %1612 = vmatpush2.bf16.msra.mxu0 %v1407
    %1613 = vmatprep.subr.bf16.mxu0 %v1402
    %1614 = vmatpush2.bf16.msra.mxu0 %v1401
    %1615 = vmatprep.subr.bf16.mxu0 %v1396
    %1616 = vmatpush2.bf16.msra.mxu0 %v1395
    %1617 = vmatprep.subr.bf16.mxu0 %v1390
    %1618 = vmatpush2.bf16.msra.mxu0 %v1389
    %1619 = vmatprep.subr.bf16.mxu0 %v1384
    %1620 = vmatpush2.bf16.msra.mxu0 %v1383
    %1621 = vmatprep.subr.bf16.mxu0 %v1378
    %1622 = vmatpush2.bf16.msra.mxu0 %v1377
    %1623 = vmatprep.subr.bf16.mxu0 %v1372
    %1624 = vmatpush2.bf16.msra.mxu0 %v1371
    %1625 = vmatprep.mubr.bf16.mxu0 %v902
    %1626 = vmatmul.mubr.bf16.gmra.mxu0 %v901
    %v1627 = vpop.f32.mrf.mxu0
    %v1628 = vadd.f32 %v1020, %v1627
    %v1629 = vpop.f32.mrf.mxu0
    %v1630 = vadd.f32 %v1024, %v1629
    %v1631 = vpop.f32.mrf.mxu0
    %v1632 = vpop.f32.mrf.mxu0
    %1633 = vdwg.mxu0
    %v1634 = vmax.f32 %v1546, 0.0
    %v1635 = vmax.f32 %v1548, 0.0
    %v1636 = vmax.f32 %v1587, 0.0
    %v1637 = vmax.f32 %v1589, 0.0
    %v1638 = vmax.f32 %v1628, 0.0
    %v1639 = vmax.f32 %v1630, 0.0
    %v1640 = vpack.c.bf16 %v1634, %v1634
    %v1641 = vpack.c.bf16 %v1635, %v1635
    %v1642 = vpack.c.bf16 %v1636, %v1636
    %v1643 = vpack.c.bf16 %v1637, %v1637
    %v1644 = vpack.c.bf16 %v1638, %v1638
    %v1645 = vpack.c.bf16 %v1639, %v1639
    %v1652 = vcombine.low %v1640, %v1641
    %v1653 = vcombine.low %v1642, %v1643
    %v1654 = vcombine.low %v1644, %v1645
    %v1656 = vunpack.c.l.s4 1966171168
    %v1657 = vunpack.c.0.s8 %v1656
    %v1658 = vlaneseq
    %v1659 = vshrl.u32 %v1658, 7
    %v1660 = vsub.s32 %v1657, %v1659
    %v1661 = vrot.slane %v1652, %v1660
    %v1663 = vunpack.c.l.s4 1966171168
    %v1664 = vunpack.c.0.s8 %v1663
    %v1665 = vlaneseq
    %v1666 = vshrl.u32 %v1665, 7
    %v1667 = vsub.s32 %v1664, %v1666
    %v1668 = vrot.slane %v1653, %v1667
    %v1670 = vunpack.c.l.s4 1966171168
    %v1671 = vunpack.c.0.s8 %v1670
    %v1672 = vlaneseq
    %v1673 = vshrl.u32 %v1672, 7
    %v1674 = vsub.s32 %v1671, %v1673
    %v1675 = vrot.slane %v1654, %v1674
    %v1676 = vcombine.low %v1661, %v1668
    %v1678 = vunpack.c.l.s4 1966171168
    %v1679 = vunpack.c.0.s8 %v1678
    %v1680 = vlaneseq
    %v1681 = vshrl.u32 %v1680, 7
    %v1682 = vsub.s32 %v1679, %v1681
    %v1683 = vrot.slane %v1676, %v1682
    %v1685 = vunpack.c.l.s4 1966171168
    %v1686 = vunpack.c.0.s8 %v1685
    %v1687 = vlaneseq
    %v1688 = vshrl.u32 %v1687, 7
    %v1689 = vsub.s32 %v1686, %v1688
    %v1690 = vrot.slane %v1675, %v1689
    %v1691 = vcombine.low %v1683, %v1690
    %1693 = vst [vmem:[#allocation2] sm:$0x3f] %v1691
    %v1694 = vld [vmem:[%s5] sm:$0xf]
    %v1695 = vld [vmem:[%s5 + $0x4] sm:$0xf]
    %v1696 = vld [vmem:[%s5 + $0x8] sm:$0xf]
    %v1697 = vld [vmem:[%s5 + $0xc] sm:$0xf]
    %v1698 = vld [vmem:[%s5 + $0x10] sm:$0xf]
    %v1699 = vld [vmem:[%s5 + $0x14] sm:$0xf]
    %v1700 = vld [vmem:[%s5 + $0x18] sm:$0xf]
    %v1701 = vld [vmem:[%s5 + $0x1c] sm:$0xf]
    %v1702 = vld [vmem:[%s5 + $0x20] sm:$0xf]
    %v1703 = vld [vmem:[%s5 + $0x24] sm:$0xf]
    %v1704 = vld [vmem:[%s5 + $0x28] sm:$0xf]
    %v1705 = vld [vmem:[%s5 + $0x2c] sm:$0xf]
    %v1706 = vld [vmem:[%s5 + $0x30] sm:$0xf]
    %v1707 = vld [vmem:[%s5 + $0x34] sm:$0xf]
    %v1708 = vld [vmem:[%s5 + $0x38] sm:$0xf]
    %v1709 = vld [vmem:[%s5 + $0x3c] sm:$0xf]
    %v1710 = vld [vmem:[%s5 + $0x40] sm:$0xf]
    %v1711 = vld [vmem:[%s5 + $0x44] sm:$0xf]
    %v1712 = vld [vmem:[%s5 + $0x48] sm:$0xf]
    %v1713 = vld [vmem:[%s5 + $0x4c] sm:$0xf]
    %v1714 = vld [vmem:[%s5 + $0x50] sm:$0xf]
    %v1715 = vld [vmem:[%s5 + $0x54] sm:$0xf]
    %v1716 = vld [vmem:[%s5 + $0x58] sm:$0xf]
    %v1717 = vld [vmem:[%s5 + $0x5c] sm:$0xf]
    %v1718 = vld [vmem:[%s5 + $0x60] sm:$0xf]
    %v1719 = vld [vmem:[%s5 + $0x64] sm:$0xf]
    %v1720 = vld [vmem:[%s5 + $0x68] sm:$0xf]
    %v1721 = vld [vmem:[%s5 + $0x6c] sm:$0xf]
    %v1722 = vld [vmem:[%s5 + $0x70] sm:$0xf]
    %v1723 = vld [vmem:[%s5 + $0x74] sm:$0xf]
    %v1724 = vld [vmem:[%s5 + $0x78] sm:$0xf]
    %v1725 = vld [vmem:[%s5 + $0x7c] sm:$0xf]
    %v1726 = vld [vmem:[%s5 + $0x80] sm:$0xf]
    %v1727 = vld [vmem:[%s5 + $0x84] sm:$0xf]
    %v1728 = vld [vmem:[%s5 + $0x88] sm:$0xf]
    %v1729 = vld [vmem:[%s5 + $0x8c] sm:$0xf]
    %v1730 = vld [vmem:[%s5 + $0x90] sm:$0xf]
    %v1731 = vld [vmem:[%s5 + $0x94] sm:$0xf]
    %v1732 = vld [vmem:[%s5 + $0x98] sm:$0xf]
    %v1733 = vld [vmem:[%s5 + $0x9c] sm:$0xf]
    %v1734 = vld [vmem:[%s5 + $0xa0] sm:$0xf]
    %v1735 = vld [vmem:[%s5 + $0xa4] sm:$0xf]
    %v1736 = vld [vmem:[%s5 + $0xa8] sm:$0xf]
    %v1737 = vld [vmem:[%s5 + $0xac] sm:$0xf]
    %v1738 = vld [vmem:[%s5 + $0xb0] sm:$0xf]
    %v1739 = vld [vmem:[%s5 + $0xb4] sm:$0xf]
    %v1740 = vld [vmem:[%s5 + $0xb8] sm:$0xf]
    %v1741 = vld [vmem:[%s5 + $0xbc] sm:$0xf]
    %v1742 = vld [vmem:[%s5 + $0xc0] sm:$0xf]
    %v1743 = vld [vmem:[%s5 + $0xc4] sm:$0xf]
    %v1744 = vld [vmem:[%s5 + $0xc8] sm:$0xf]
    %v1745 = vld [vmem:[%s5 + $0xcc] sm:$0xf]
    %v1746 = vld [vmem:[%s5 + $0xd0] sm:$0xf]
    %v1747 = vld [vmem:[%s5 + $0xd4] sm:$0xf]
    %v1748 = vld [vmem:[%s5 + $0xd8] sm:$0xf]
    %v1749 = vld [vmem:[%s5 + $0xdc] sm:$0xf]
    %v1750 = vld [vmem:[%s5 + $0xe0] sm:$0xf]
    %v1751 = vld [vmem:[%s5 + $0xe4] sm:$0xf]
    %v1752 = vld [vmem:[%s5 + $0xe8] sm:$0xf]
    %v1753 = vld [vmem:[%s5 + $0xec] sm:$0xf]
    %v1754 = vld [vmem:[%s5 + $0xf0] sm:$0xf]
    %v1755 = vld [vmem:[%s5 + $0xf4] sm:$0xf]
    %v1756 = vld [vmem:[%s5 + $0xf8] sm:$0xf]
    %v1757 = vld [vmem:[%s5 + $0xfc] sm:$0xf]
    %v1758 = vld [vmem:[%s5 + $0x100] sm:$0xf]
    %v1759 = vld [vmem:[%s5 + $0x104] sm:$0xf]
    %v1760 = vld [vmem:[%s5 + $0x108] sm:$0xf]
    %v1761 = vld [vmem:[%s5 + $0x10c] sm:$0xf]
    %v1762 = vld [vmem:[%s5 + $0x110] sm:$0xf]
    %v1763 = vld [vmem:[%s5 + $0x114] sm:$0xf]
    %v1764 = vld [vmem:[%s5 + $0x118] sm:$0xf]
    %v1765 = vld [vmem:[%s5 + $0x11c] sm:$0xf]
    %v1766 = vld [vmem:[%s5 + $0x120] sm:$0xf]
    %v1767 = vld [vmem:[%s5 + $0x124] sm:$0xf]
    %v1768 = vld [vmem:[%s5 + $0x128] sm:$0xf]
    %v1769 = vld [vmem:[%s5 + $0x12c] sm:$0xf]
    %v1770 = vld [vmem:[%s5 + $0x130] sm:$0xf]
    %v1771 = vld [vmem:[%s5 + $0x134] sm:$0xf]
    %v1772 = vld [vmem:[%s5 + $0x138] sm:$0xf]
    %v1773 = vld [vmem:[%s5 + $0x13c] sm:$0xf]
    %v1774 = vld [vmem:[%s5 + $0x140] sm:$0xf]
    %v1775 = vld [vmem:[%s5 + $0x144] sm:$0xf]
    %v1776 = vld [vmem:[%s5 + $0x148] sm:$0xf]
    %v1777 = vld [vmem:[%s5 + $0x14c] sm:$0xf]
    %v1778 = vld [vmem:[%s5 + $0x150] sm:$0xf]
    %v1779 = vld [vmem:[%s5 + $0x154] sm:$0xf]
    %v1780 = vld [vmem:[%s5 + $0x158] sm:$0xf]
    %v1781 = vld [vmem:[%s5 + $0x15c] sm:$0xf]
    %v1782 = vld [vmem:[%s5 + $0x160] sm:$0xf]
    %v1783 = vld [vmem:[%s5 + $0x164] sm:$0xf]
    %v1784 = vld [vmem:[%s5 + $0x168] sm:$0xf]
    %v1785 = vld [vmem:[%s5 + $0x16c] sm:$0xf]
    %v1786 = vld [vmem:[%s5 + $0x170] sm:$0xf]
    %v1787 = vld [vmem:[%s5 + $0x174] sm:$0xf]
    %v1788 = vld [vmem:[%s5 + $0x178] sm:$0xf]
    %v1789 = vld [vmem:[%s5 + $0x17c] sm:$0xf]
    %v1790 = vld [vmem:[%s6] sm:$0x1]
    %v1792 = vlaneseq
    %v1793 = vshrl.u32 %v1792, 7
    %v1794 = vsub.s32 0, %v1793
    %v1795 = vrot.slane %v1790, %v1794
    %v1893 = vunpack.c.l.b16 %v1694
    %v1894 = vunpack.c.l.b16 %v1695
    %v1895 = vunpack.c.l.b16 %v1696
    %v1896 = vunpack.c.l.b16 %v1697
    %v1897 = vunpack.c.l.b16 %v1698
    %v1898 = vunpack.c.l.b16 %v1699
    %v1899 = vunpack.c.l.b16 %v1700
    %v1900 = vunpack.c.l.b16 %v1701
    %v1901 = vunpack.c.l.b16 %v1702
    %v1902 = vunpack.c.l.b16 %v1703
    %v1903 = vunpack.c.l.b16 %v1704
    %v1904 = vunpack.c.l.b16 %v1705
    %v1905 = vunpack.c.l.b16 %v1706
    %v1906 = vunpack.c.l.b16 %v1707
    %v1907 = vunpack.c.l.b16 %v1708
    %v1908 = vunpack.c.l.b16 %v1709
    %v1909 = vunpack.c.l.b16 %v1710
    %v1910 = vunpack.c.l.b16 %v1711
    %v1911 = vunpack.c.l.b16 %v1712
    %v1912 = vunpack.c.l.b16 %v1713
    %v1913 = vunpack.c.l.b16 %v1714
    %v1914 = vunpack.c.l.b16 %v1715
    %v1915 = vunpack.c.l.b16 %v1716
    %v1916 = vunpack.c.l.b16 %v1717
    %v1917 = vunpack.c.l.b16 %v1718
    %v1918 = vunpack.c.l.b16 %v1719
    %v1919 = vunpack.c.l.b16 %v1720
    %v1920 = vunpack.c.l.b16 %v1721
    %v1921 = vunpack.c.l.b16 %v1722
    %v1922 = vunpack.c.l.b16 %v1723
    %v1923 = vunpack.c.l.b16 %v1724
    %v1924 = vunpack.c.l.b16 %v1725
    %v1925 = vunpack.c.l.b16 %v1726
    %v1926 = vunpack.c.l.b16 %v1727
    %v1927 = vunpack.c.l.b16 %v1728
    %v1928 = vunpack.c.l.b16 %v1729
    %v1929 = vunpack.c.l.b16 %v1730
    %v1930 = vunpack.c.l.b16 %v1731
    %v1931 = vunpack.c.l.b16 %v1732
    %v1932 = vunpack.c.l.b16 %v1733
    %v1933 = vunpack.c.l.b16 %v1734
    %v1934 = vunpack.c.l.b16 %v1735
    %v1935 = vunpack.c.l.b16 %v1736
    %v1936 = vunpack.c.l.b16 %v1737
    %v1937 = vunpack.c.l.b16 %v1738
    %v1938 = vunpack.c.l.b16 %v1739
    %v1939 = vunpack.c.l.b16 %v1740
    %v1940 = vunpack.c.l.b16 %v1741
    %v1941 = vunpack.c.l.b16 %v1742
    %v1942 = vunpack.c.l.b16 %v1743
    %v1943 = vunpack.c.l.b16 %v1744
    %v1944 = vunpack.c.l.b16 %v1745
    %v1945 = vunpack.c.l.b16 %v1746
    %v1946 = vunpack.c.l.b16 %v1747
    %v1947 = vunpack.c.l.b16 %v1748
    %v1948 = vunpack.c.l.b16 %v1749
    %v1949 = vunpack.c.l.b16 %v1750
    %v1950 = vunpack.c.l.b16 %v1751
    %v1951 = vunpack.c.l.b16 %v1752
    %v1952 = vunpack.c.l.b16 %v1753
    %v1953 = vunpack.c.l.b16 %v1754
    %v1954 = vunpack.c.l.b16 %v1755
    %v1955 = vunpack.c.l.b16 %v1756
    %v1956 = vunpack.c.l.b16 %v1757
    %v1957 = vunpack.c.l.b16 %v1758
    %v1958 = vunpack.c.l.b16 %v1759
    %v1959 = vunpack.c.l.b16 %v1760
    %v1960 = vunpack.c.l.b16 %v1761
    %v1961 = vunpack.c.l.b16 %v1762
    %v1962 = vunpack.c.l.b16 %v1763
    %v1963 = vunpack.c.l.b16 %v1764
    %v1964 = vunpack.c.l.b16 %v1765
    %v1965 = vunpack.c.l.b16 %v1766
    %v1966 = vunpack.c.l.b16 %v1767
    %v1967 = vunpack.c.l.b16 %v1768
    %v1968 = vunpack.c.l.b16 %v1769
    %v1969 = vunpack.c.l.b16 %v1770
    %v1970 = vunpack.c.l.b16 %v1771
    %v1971 = vunpack.c.l.b16 %v1772
    %v1972 = vunpack.c.l.b16 %v1773
    %v1973 = vunpack.c.l.b16 %v1774
    %v1974 = vunpack.c.l.b16 %v1775
    %v1975 = vunpack.c.l.b16 %v1776
    %v1976 = vunpack.c.l.b16 %v1777
    %v1977 = vunpack.c.l.b16 %v1778
    %v1978 = vunpack.c.l.b16 %v1779
    %v1979 = vunpack.c.l.b16 %v1780
    %v1980 = vunpack.c.l.b16 %v1781
    %v1981 = vunpack.c.l.b16 %v1782
    %v1982 = vunpack.c.l.b16 %v1783
    %v1983 = vunpack.c.l.b16 %v1784
    %v1984 = vunpack.c.l.b16 %v1785
    %v1985 = vunpack.c.l.b16 %v1786
    %v1986 = vunpack.c.l.b16 %v1787
    %v1987 = vunpack.c.l.b16 %v1788
    %v1988 = vunpack.c.l.b16 %v1789
    %v1989 = vpack.c.b16 %v1894, %v1893
    %v1990 = vpack.c.b16 %v1896, %v1895
    %v1991 = vpack.c.b16 %v1898, %v1897
    %v1992 = vpack.c.b16 %v1900, %v1899
    %v1993 = vpack.c.b16 %v1902, %v1901
    %v1994 = vpack.c.b16 %v1904, %v1903
    %v1995 = vpack.c.b16 %v1906, %v1905
    %v1996 = vpack.c.b16 %v1908, %v1907
    %v1997 = vpack.c.b16 %v1910, %v1909
    %v1998 = vpack.c.b16 %v1912, %v1911
    %v1999 = vpack.c.b16 %v1914, %v1913
    %v2000 = vpack.c.b16 %v1916, %v1915
    %v2001 = vpack.c.b16 %v1918, %v1917
    %v2002 = vpack.c.b16 %v1920, %v1919
    %v2003 = vpack.c.b16 %v1922, %v1921
    %v2004 = vpack.c.b16 %v1924, %v1923
    %v2005 = vpack.c.b16 %v1926, %v1925
    %v2006 = vpack.c.b16 %v1928, %v1927
    %v2007 = vpack.c.b16 %v1930, %v1929
    %v2008 = vpack.c.b16 %v1932, %v1931
    %v2009 = vpack.c.b16 %v1934, %v1933
    %v2010 = vpack.c.b16 %v1936, %v1935
    %v2011 = vpack.c.b16 %v1938, %v1937
    %v2012 = vpack.c.b16 %v1940, %v1939
    %v2013 = vpack.c.b16 %v1942, %v1941
    %v2014 = vpack.c.b16 %v1944, %v1943
    %v2015 = vpack.c.b16 %v1946, %v1945
    %v2016 = vpack.c.b16 %v1948, %v1947
    %v2017 = vpack.c.b16 %v1950, %v1949
    %v2018 = vpack.c.b16 %v1952, %v1951
    %v2019 = vpack.c.b16 %v1954, %v1953
    %v2020 = vpack.c.b16 %v1956, %v1955
    %v2021 = vpack.c.b16 %v1958, %v1957
    %v2022 = vpack.c.b16 %v1960, %v1959
    %v2023 = vpack.c.b16 %v1962, %v1961
    %v2024 = vpack.c.b16 %v1964, %v1963
    %v2025 = vpack.c.b16 %v1966, %v1965
    %v2026 = vpack.c.b16 %v1968, %v1967
    %v2027 = vpack.c.b16 %v1970, %v1969
    %v2028 = vpack.c.b16 %v1972, %v1971
    %v2029 = vpack.c.b16 %v1974, %v1973
    %v2030 = vpack.c.b16 %v1976, %v1975
    %v2031 = vpack.c.b16 %v1978, %v1977
    %v2032 = vpack.c.b16 %v1980, %v1979
    %v2033 = vpack.c.b16 %v1982, %v1981
    %v2034 = vpack.c.b16 %v1984, %v1983
    %v2035 = vpack.c.b16 %v1986, %v1985
    %v2036 = vpack.c.b16 %v1988, %v1987
    %2085 = vmatprep.subr.bf16.mxu0 0
    %2086 = vmatpush1.bf16.msra.mxu0 %v1996
    %2087 = vmatprep.subr.bf16.mxu0 0
    %2088 = vmatpush1.bf16.msra.mxu0 %v1995
    %2089 = vmatprep.subr.bf16.mxu0 0
    %2090 = vmatpush1.bf16.msra.mxu0 %v1994
    %2091 = vmatprep.subr.bf16.mxu0 0
    %2092 = vmatpush1.bf16.msra.mxu0 %v1993
    %2093 = vmatprep.subr.bf16.mxu0 0
    %2094 = vmatpush1.bf16.msra.mxu0 %v1992
    %2095 = vmatprep.subr.bf16.mxu0 0
    %2096 = vmatpush1.bf16.msra.mxu0 %v1991
    %2097 = vmatprep.subr.bf16.mxu0 0
    %2098 = vmatpush1.bf16.msra.mxu0 %v1990
    %2099 = vmatprep.subr.bf16.mxu0 0
    %2100 = vmatpush1.bf16.msra.mxu0 %v1989
    %2101 = vmatprep.subr.bf16.mxu0 0
    %2102 = vmatpush2.bf16.msra.mxu0 %v2004
    %2103 = vmatprep.subr.bf16.mxu0 0
    %2104 = vmatpush2.bf16.msra.mxu0 %v2003
    %2105 = vmatprep.subr.bf16.mxu0 0
    %2106 = vmatpush2.bf16.msra.mxu0 %v2002
    %2107 = vmatprep.subr.bf16.mxu0 0
    %2108 = vmatpush2.bf16.msra.mxu0 %v2001
    %2109 = vmatprep.subr.bf16.mxu0 0
    %2110 = vmatpush2.bf16.msra.mxu0 %v2000
    %2111 = vmatprep.subr.bf16.mxu0 0
    %2112 = vmatpush2.bf16.msra.mxu0 %v1999
    %2113 = vmatprep.subr.bf16.mxu0 0
    %2114 = vmatpush2.bf16.msra.mxu0 %v1998
    %2115 = vmatprep.subr.bf16.mxu0 0
    %2116 = vmatpush2.bf16.msra.mxu0 %v1997
    %2117 = vmatprep.mubr.bf16.mxu0 %v1641
    %2118 = vmatmul.mubr.bf16.gmra.mxu0 %v1640
    %v2119 = vpop.f32.mrf.mxu0
    %v2120 = vadd.f32 %v1795, %v2119
    %v2121 = vpop.f32.mrf.mxu0
    %v2122 = vpop.f32.mrf.mxu0
    %v2123 = vpop.f32.mrf.mxu0
    %2124 = vdwg.mxu0
    %2125 = vmatprep.subr.bf16.mxu0 0
    %2126 = vmatpush1.bf16.msra.mxu0 %v2012
    %2127 = vmatprep.subr.bf16.mxu0 0
    %2128 = vmatpush1.bf16.msra.mxu0 %v2011
    %2129 = vmatprep.subr.bf16.mxu0 0
    %2130 = vmatpush1.bf16.msra.mxu0 %v2010
    %2131 = vmatprep.subr.bf16.mxu0 0
    %2132 = vmatpush1.bf16.msra.mxu0 %v2009
    %2133 = vmatprep.subr.bf16.mxu0 0
    %2134 = vmatpush1.bf16.msra.mxu0 %v2008
    %2135 = vmatprep.subr.bf16.mxu0 0
    %2136 = vmatpush1.bf16.msra.mxu0 %v2007
    %2137 = vmatprep.subr.bf16.mxu0 0
    %2138 = vmatpush1.bf16.msra.mxu0 %v2006
    %2139 = vmatprep.subr.bf16.mxu0 0
    %2140 = vmatpush1.bf16.msra.mxu0 %v2005
    %2141 = vmatprep.subr.bf16.mxu0 0
    %2142 = vmatpush2.bf16.msra.mxu0 %v2020
    %2143 = vmatprep.subr.bf16.mxu0 0
    %2144 = vmatpush2.bf16.msra.mxu0 %v2019
    %2145 = vmatprep.subr.bf16.mxu0 0
    %2146 = vmatpush2.bf16.msra.mxu0 %v2018
    %2147 = vmatprep.subr.bf16.mxu0 0
    %2148 = vmatpush2.bf16.msra.mxu0 %v2017
    %2149 = vmatprep.subr.bf16.mxu0 0
    %2150 = vmatpush2.bf16.msra.mxu0 %v2016
    %2151 = vmatprep.subr.bf16.mxu0 0
    %2152 = vmatpush2.bf16.msra.mxu0 %v2015
    %2153 = vmatprep.subr.bf16.mxu0 0
    %2154 = vmatpush2.bf16.msra.mxu0 %v2014
    %2155 = vmatprep.subr.bf16.mxu0 0
    %2156 = vmatpush2.bf16.msra.mxu0 %v2013
    %2157 = vmatprep.mubr.bf16.mxu0 %v1643
    %2158 = vmatmul.mubr.bf16.gmra.mxu0 %v1642
    %v2159 = vpop.f32.mrf.mxu0
    %v2160 = vadd.f32 %v2120, %v2159
    %v2161 = vpop.f32.mrf.mxu0
    %v2162 = vpop.f32.mrf.mxu0
    %v2163 = vpop.f32.mrf.mxu0
    %2164 = vdwg.mxu0
    %2165 = vmatprep.subr.bf16.mxu0 0
    %2166 = vmatpush1.bf16.msra.mxu0 %v2028
    %2167 = vmatprep.subr.bf16.mxu0 0
    %2168 = vmatpush1.bf16.msra.mxu0 %v2027
    %2169 = vmatprep.subr.bf16.mxu0 0
    %2170 = vmatpush1.bf16.msra.mxu0 %v2026
    %2171 = vmatprep.subr.bf16.mxu0 0
    %2172 = vmatpush1.bf16.msra.mxu0 %v2025
    %2173 = vmatprep.subr.bf16.mxu0 0
    %2174 = vmatpush1.bf16.msra.mxu0 %v2024
    %2175 = vmatprep.subr.bf16.mxu0 0
    %2176 = vmatpush1.bf16.msra.mxu0 %v2023
    %2177 = vmatprep.subr.bf16.mxu0 0
    %2178 = vmatpush1.bf16.msra.mxu0 %v2022
    %2179 = vmatprep.subr.bf16.mxu0 0
    %2180 = vmatpush1.bf16.msra.mxu0 %v2021
    %2181 = vmatprep.subr.bf16.mxu0 0
    %2182 = vmatpush2.bf16.msra.mxu0 %v2036
    %2183 = vmatprep.subr.bf16.mxu0 0
    %2184 = vmatpush2.bf16.msra.mxu0 %v2035
    %2185 = vmatprep.subr.bf16.mxu0 0
    %2186 = vmatpush2.bf16.msra.mxu0 %v2034
    %2187 = vmatprep.subr.bf16.mxu0 0
    %2188 = vmatpush2.bf16.msra.mxu0 %v2033
    %2189 = vmatprep.subr.bf16.mxu0 0
    %2190 = vmatpush2.bf16.msra.mxu0 %v2032
    %2191 = vmatprep.subr.bf16.mxu0 0
    %2192 = vmatpush2.bf16.msra.mxu0 %v2031
    %2193 = vmatprep.subr.bf16.mxu0 0
    %2194 = vmatpush2.bf16.msra.mxu0 %v2030
    %2195 = vmatprep.subr.bf16.mxu0 0
    %2196 = vmatpush2.bf16.msra.mxu0 %v2029
    %2197 = vmatprep.mubr.bf16.mxu0 %v1645
    %2198 = vmatmul.mubr.bf16.gmra.mxu0 %v1644
    %v2199 = vpop.f32.mrf.mxu0
    %v2200 = vadd.f32 %v2160, %v2199
    %v2201 = vpop.f32.mrf.mxu0
    %v2202 = vpop.f32.mrf.mxu0
    %v2203 = vpop.f32.mrf.mxu0
    %2204 = vdwg.mxu0
    %2205 = vst [vmem:[#allocation4] sm:$0x3] %v2200
    // Predicated region
    $region30: #{representation_engine_forward.1} parent=1 // pred_check
      _
    $region31: #{representation_engine_forward.1} parent=1 // pred_check_branch
      %2207 = sbr.rel (0) target = $region33
    $region32: #{representation_engine_forward.1} parent=1 // pred_region
      %s2209 = ssub.s32 96, 96
      %2210 = vsyncadd [#allocation3], %s2209
      %s2212 = sshll.u32 [#allocation2], 4
      %s2213 = int_to_ptr.vmem [resolvable:$true] %s2212
      %2215 = dma.vmem_to_hbm [thread:$0]  %s2213, 96, %s7, [#allocation3]
    $region33: #{representation_engine_forward.1} parent=1 // pred_fallthru
      _
    // Predicated region
    $region34: #{representation_engine_forward.1} parent=1 // pred_check
      _
    $region35: #{representation_engine_forward.1} parent=1 // pred_check_branch
      %2217 = sbr.rel (0) target = $region37
    $region36: #{representation_engine_forward.1} parent=1 // pred_region
      %s2219 = ssub.s32 32, 32
      %2220 = vsyncadd [#allocation5], %s2219
      %s2222 = sshll.u32 [#allocation4], 4
      %s2223 = int_to_ptr.vmem [resolvable:$true] %s2222
      %2225 = dma.vmem_to_hbm [thread:$0]  %s2223, 32, %s8, [#allocation5]
    $region37: #{representation_engine_forward.1} parent=1 // pred_fallthru
      _
    // Predicated region
    $region38: #{representation_engine_forward.1} parent=1 // pred_check
      _
    $region39: #{representation_engine_forward.1} parent=1 // pred_check_branch
      %2227 = sbr.rel (0) target = $region41
    $region40: #{representation_engine_forward.1} parent=1 // pred_region
      %2228 = dma.done [#allocation3], 96
    $region41: #{representation_engine_forward.1} parent=1 // pred_fallthru
      _
    // Predicated region
    $region42: #{representation_engine_forward.1} parent=1 // pred_check
      _
    $region43: #{representation_engine_forward.1} parent=1 // pred_check_branch
      %2230 = sbr.rel (0) target = $region45
    $region44: #{representation_engine_forward.1} parent=1 // pred_region
      %2231 = dma.done [#allocation5], 32
    $region45: #{representation_engine_forward.1} parent=1 // pred_fallthru
      _
    %2232 = vsyncpa [#allocation3], 1
    %2233 = vsyncpa [#allocation5], 1

</llo_original>
